<compile_context>
chip_gen: v5e
topology: v5e:2x2
jax: 0.10.0
libtpu: 0.0.40
codegen_flags: <defaults>
</compile_context>

<pallas_src>
import math
from functools import partial

import jax
import jax.numpy as jnp
from jax.experimental import pallas as pl
from jax.experimental.pallas import tpu as pltpu


def _round_up(v, m):
    return (v + m - 1) // m * m


def _largest_tile(n_pad, desired):
    """Largest multiple of 128 that divides n_pad and is <= desired."""
    best = 128
    t = 128
    cap = min(desired, n_pad)
    while t <= cap:
        if n_pad % t == 0:
            best = t
        t += 128
    return best


# ----------------------------------------------------------------------------
# Stage 1: XW with the source normalization folded in (row-tiled, bf16 out).
# ----------------------------------------------------------------------------
def xw_scale_kernel(x_ref, w_ref, ns_ref, o_ref):
    # x: [tm, INp]  w: [INp, Hp]  ns: [tm, 1] (rsqrt of clamped out-degree)
    xw = jnp.dot(x_ref[...], w_ref[...], preferred_element_type=jnp.float32)
    o_ref[...] = (xw * ns_ref[...]).astype(o_ref.dtype)


# ----------------------------------------------------------------------------
# Stage 2: tiled aggregation  acc += A[i, k] @ XWs[k]  with fused epilogue.
# ----------------------------------------------------------------------------
def gcn_agg_kernel(tk, xw_resident, a_ref, xw_ref, nd_ref, b_ref, o_ref,
                   acc_ref):
    k = pl.program_id(1)

    @pl.when(k == 0)
    def _():
        acc_ref[...] = jnp.zeros_like(acc_ref)

    # A tile arrives as int8 (1 byte/elem HBM stream); upcast to bf16 (exact
    # for 0/1) so the dot uses the native bf16 MXU path with f32 accumulation.
    a_tile = a_ref[...].astype(jnp.bfloat16)
    if xw_resident:
        # Whole XW lives in VMEM (DMA'd once); slice the k-th reduction block.
        start = pl.multiple_of(k * tk, 128)
        xw_tile = xw_ref[pl.ds(start, tk), :]
    else:
        xw_tile = xw_ref[...]
    acc_ref[...] += jnp.dot(a_tile, xw_tile,
                            preferred_element_type=jnp.float32)

    @pl.when(k == pl.num_programs(1) - 1)
    def _():
        # Destination normalization + bias, then L2 row-normalization.
        rst = acc_ref[...] * nd_ref[...] + b_ref[...]            # [tm, Hp]
        sq = jnp.sum(rst * rst, axis=1, keepdims=True)           # [tm, 1]
        # Padded hidden columns are exactly zero, so sq is the true row norm^2.
        # Epsilon guard avoids NaN on all-zero (padded) rows.
        o_ref[...] = rst * jax.lax.rsqrt(jnp.maximum(sq, 1e-12))  # EUP rsqrt


@partial(jax.jit, static_argnames=("tm", "tk"))
def encoder_forward(a, x, w, b, *, tm=512, tk=512):
    """GraphConv(norm='both') + L2 row-normalization.

    a: [N, N] dense adjacency (a[i, j] = 1 for edge j -> i)
    x: [N, in_dim], w: [in_dim, hidden], b: [1, hidden] or [hidden]
    returns: [N, hidden] float32
    """
    n, in_dim = x.shape
    hidden = w.shape[1]

    in_pad = _round_up(in_dim, 128)
    h_pad = _round_up(hidden, 128)

    # ---- Tile selection (generation-aware constraints) -----------------------
    n_pad0 = _round_up(n, 128)
    tm_eff = min(tm, n_pad0)
    if n_pad0 >= 256:
        # Guarantee >= 2 row tiles so both v7x TensorCores get work.
        tm_eff = min(tm_eff, (n_pad0 // 2 // 128) * 128)
    tm_eff = max(128, (tm_eff // 128) * 128)
    n_pad = _round_up(n, tm_eff)
    tk_eff = _largest_tile(n_pad, tk)

    # ---- Single cast/pad pass over A; degrees from the int8 copy ------------
    a_p = jnp.zeros((n_pad, n_pad), jnp.int8).at[:n, :n].set(
        a.astype(jnp.int8))
    out_deg = jnp.maximum(jnp.sum(a_p, axis=0, dtype=jnp.float32), 1.0)  # src
    in_deg = jnp.maximum(jnp.sum(a_p, axis=1, dtype=jnp.float32), 1.0)   # dst
    ns_p = jax.lax.rsqrt(out_deg).reshape(n_pad, 1)
    nd_p = jax.lax.rsqrt(in_deg).reshape(n_pad, 1)

    x_p = jnp.zeros((n_pad, in_pad), jnp.float32).at[:n, :in_dim].set(
        x.astype(jnp.float32))
    w_p = jnp.zeros((in_pad, h_pad), jnp.float32).at[:in_dim, :hidden].set(
        w.astype(jnp.float32))
    b_p = jnp.zeros((1, h_pad), jnp.float32).at[:, :hidden].set(
        b.reshape(1, -1).astype(jnp.float32))

    # --- Stage 1: XW * norm_src, row-tiled, bf16 output -----------------------
    xw_scaled = pl.pallas_call(
        xw_scale_kernel,
        out_shape=jax.ShapeDtypeStruct((n_pad, h_pad), jnp.bfloat16),
        grid_spec=pltpu.PrefetchScalarGridSpec(
            num_scalar_prefetch=0,
            grid=(n_pad // tm_eff,),
            in_specs=[
                pl.BlockSpec((tm_eff, in_pad), lambda i: (i, 0)),
                pl.BlockSpec((in_pad, h_pad), lambda i: (0, 0)),
                pl.BlockSpec((tm_eff, 1), lambda i: (i, 0)),
            ],
            out_specs=pl.BlockSpec((tm_eff, h_pad), lambda i: (i, 0)),
        ),
        compiler_params=pltpu.CompilerParams(
            dimension_semantics=("parallel",)),
    )(x_p, w_p, ns_p)

    # --- Stage 2: tiled aggregation + fused epilogue ---------------------------
    # Keep the whole bf16 XW resident in VMEM when it is small (<= 8 MiB);
    # otherwise stream (tk, Hp) blocks along the reduction axis.
    xw_resident = (n_pad * h_pad * 2) <= (8 * 1024 * 1024)
    if xw_resident:
        xw_spec = pl.BlockSpec((n_pad, h_pad), lambda i, k: (0, 0))
    else:
        xw_spec = pl.BlockSpec((tk_eff, h_pad), lambda i, k: (k, 0))

    grid = (n_pad // tm_eff, n_pad // tk_eff)
    out_p = pl.pallas_call(
        partial(gcn_agg_kernel, tk_eff, xw_resident),
        out_shape=jax.ShapeDtypeStruct((n_pad, h_pad), jnp.float32),
        grid_spec=pltpu.PrefetchScalarGridSpec(
            num_scalar_prefetch=0,
            grid=grid,
            in_specs=[
                pl.BlockSpec((tm_eff, tk_eff), lambda i, k: (i, k)),  # A int8
                xw_spec,                                              # XW bf16
                pl.BlockSpec((tm_eff, 1), lambda i, k: (i, 0)),       # norm_dst
                pl.BlockSpec((1, h_pad), lambda i, k: (0, 0)),        # bias
            ],
            out_specs=pl.BlockSpec((tm_eff, h_pad), lambda i, k: (i, 0)),
            scratch_shapes=[pltpu.VMEM((tm_eff, h_pad), jnp.float32)],
        ),
        compiler_params=pltpu.CompilerParams(
            dimension_semantics=("parallel", "arbitrary"),
            vmem_limit_bytes=48 * 1024 * 1024,
        ),
    )(a_p, xw_scaled, nd_p, b_p)

    return out_p[:n, :hidden]


# ----------------------------------------------------------------------------
# Pure-JAX reference (mirrors GraphConv norm='both' + Normalize(2)).
# ----------------------------------------------------------------------------
def encoder_reference(a, x, w, b):
    in_deg = jnp.maximum(a.sum(axis=1, keepdims=True), 1.0)     # [N, 1]
    out_deg = jnp.maximum(a.sum(axis=0, keepdims=True), 1.0)    # [1, N]
    xw = x @ w
    rst = (a @ (xw * (out_deg.T ** -0.5))) * (in_deg ** -0.5) + b
    norm = jnp.sqrt(jnp.sum(rst ** 2, axis=1, keepdims=True))
    return rst / norm


if __name__ == "__main__":
    key = jax.random.PRNGKey(0)
    k_a, k_x, k_w, k_b = jax.random.split(key, 4)

    # Small graph, but large enough that the tiled grid has >1 step along the
    # row axis (N padded to 256 -> row grid of 2, exercising the accumulator
    # init/finalize and the megacore split).
    N, IN_DIM, HIDDEN = 200, 8, 32

    # Deterministic random graph (~10% edge density), features, parameters.
    a = (jax.random.uniform(k_a, (N, N)) < 0.1).astype(jnp.float32)
    x = jax.random.normal(k_x, (N, IN_DIM), dtype=jnp.float32)
    scale = (2.0 / (IN_DIM + HIDDEN)) ** 0.5
    w = scale * jax.random.normal(k_w, (IN_DIM, HIDDEN), dtype=jnp.float32)
    b = 0.01 * jax.random.normal(k_b, (1, HIDDEN), dtype=jnp.float32)

    out = encoder_forward(a, x, w, b)
    jax.block_until_ready(out)

    ref = encoder_reference(a, x, w, b)
    assert out.shape == (N, HIDDEN)
    # bf16 XW / bf16 MXU path (f32 accumulation): compare at ~1e-2.
    assert jnp.allclose(out, ref, atol=1e-2, rtol=1e-2), "mismatch vs reference"

    print("KERNEL_OK")
</pallas_src>

<mosaic_0001>
module attributes {stable_mosaic.version = 11 : i64} {
  func.func @xw_scale_kernel(%arg0: i32, %arg1: memref<128x128xf32, #tpu.memory_space<vmem>>, %arg2: memref<128x128xf32, #tpu.memory_space<vmem>>, %arg3: memref<128x1xf32, #tpu.memory_space<vmem>>, %arg4: memref<128x128xbf16, #tpu.memory_space<vmem>>) attributes {dimension_semantics = [#tpu.dimension_semantics<parallel>], iteration_bounds = array<i64: 2>, scalar_prefetch = 0 : i64, scratch_operands = 0 : i64, tpu.core_type = #tpu.core_type<tc>, window_params = [{transform_indices = @transform_0, window_bounds = array<i64: 128, 128>}, {pipeline_mode = #tpu.pipeline_mode<synchronous>, transform_indices = @transform_1, window_bounds = array<i64: 128, 128>}, {transform_indices = @transform_2, window_bounds = array<i64: 128, 1>}, {transform_indices = @transform_3, window_bounds = array<i64: 128, 128>}]} {
    %c0 = arith.constant 0 : index
    %c0_0 = arith.constant 0 : index
    %0 = vector.load %arg1[%c0, %c0_0] : memref<128x128xf32, #tpu.memory_space<vmem>>, vector<128x128xf32>
    %c0_1 = arith.constant 0 : index
    %c0_2 = arith.constant 0 : index
    %1 = vector.load %arg2[%c0_1, %c0_2] : memref<128x128xf32, #tpu.memory_space<vmem>>, vector<128x128xf32>
    %cst = arith.constant dense<0.000000e+00> : vector<128x128xf32>
    %2 = tpu.matmul %0, %1, %cst {dimension_numbers = #tpu.dot_dimension_numbers<[1], [0], [0], [1], [0, 0, 1, 1], [], []>} : vector<128x128xf32>, vector<128x128xf32>, vector<128x128xf32> -> vector<128x128xf32>
    %c0_3 = arith.constant 0 : index
    %c0_4 = arith.constant 0 : index
    %3 = vector.load %arg3[%c0_3, %c0_4] : memref<128x1xf32, #tpu.memory_space<vmem>>, vector<128x1xf32>
    %4 = vector.broadcast %3 : vector<128x1xf32> to vector<128x128xf32>
    %5 = arith.mulf %2, %4 : vector<128x128xf32>
    %6 = arith.truncf %5 : vector<128x128xf32> to vector<128x128xbf16>
    %c0_5 = arith.constant 0 : index
    %c0_6 = arith.constant 0 : index
    %7 = vector.load %arg4[%c0_5, %c0_6] : memref<128x128xbf16, #tpu.memory_space<vmem>>, vector<128x128xbf16>
    tpu.vector_store %arg4[%c0_5, %c0_6], %6 {strides = array<i32>} : memref<128x128xbf16, #tpu.memory_space<vmem>>, vector<128x128xbf16>,
    return
  }
  func.func @transform_0(%arg0: i32) -> (i32, i32) {
    %c0_i32 = arith.constant 0 : i32
    %c0_i32_0 = arith.constant 0 : i32
    return %arg0, %c0_i32 : i32, i32
  }
  func.func @transform_1(%arg0: i32) -> (i32, i32) {
    %c0_i32 = arith.constant 0 : i32
    %c0_i32_0 = arith.constant 0 : i32
    %c0_i32_1 = arith.constant 0 : i32
    return %c0_i32, %c0_i32_0 : i32, i32
  }
  func.func @transform_2(%arg0: i32) -> (i32, i32) {
    %c0_i32 = arith.constant 0 : i32
    %c0_i32_0 = arith.constant 0 : i32
    return %arg0, %c0_i32 : i32, i32
  }
  func.func @transform_3(%arg0: i32) -> (i32, i32) {
    %c0_i32 = arith.constant 0 : i32
    %c0_i32_0 = arith.constant 0 : i32
    return %arg0, %c0_i32 : i32, i32
  }
}

module attributes {stable_mosaic.version = 11 : i64} {
  func.func @gcn_agg_kernel(%arg0: i32, %arg1: i32, %arg2: memref<128x256xi8, #tpu.memory_space<vmem>>, %arg3: memref<256x128xbf16, #tpu.memory_space<vmem>>, %arg4: memref<128x1xf32, #tpu.memory_space<vmem>>, %arg5: memref<1x128xf32, #tpu.memory_space<vmem>>, %arg6: memref<128x128xf32, #tpu.memory_space<vmem>>, %arg7: memref<128x128xf32, #tpu.memory_space<vmem>>) attributes {dimension_semantics = [#tpu.dimension_semantics<parallel>, #tpu.dimension_semantics<arbitrary>], iteration_bounds = array<i64: 2, 1>, scalar_prefetch = 0 : i64, scratch_operands = 1 : i64, tpu.core_type = #tpu.core_type<tc>, window_params = [{transform_indices = @transform_0, window_bounds = array<i64: 128, 256>}, {pipeline_mode = #tpu.pipeline_mode<synchronous>, transform_indices = @transform_1, window_bounds = array<i64: 256, 128>}, {transform_indices = @transform_2, window_bounds = array<i64: 128, 1>}, {pipeline_mode = #tpu.pipeline_mode<synchronous>, transform_indices = @transform_3, window_bounds = array<i64: 1, 128>}, {transform_indices = @transform_4, window_bounds = array<i64: 128, 128>}]} {
    %c0_i32 = arith.constant 0 : i32
    %0 = arith.cmpi eq, %arg1, %c0_i32 : i32
    %1 = arith.extui %0 : i1 to i32
    %c0_i32_0 = arith.constant 0 : i32
    %2 = arith.cmpi ne, %1, %c0_i32_0 : i32
    scf.if %2 {
      %cst_9 = arith.constant 0.000000e+00 : f32
      %16 = vector.broadcast %cst_9 : f32 to vector<128x128xf32>
      %c0_10 = arith.constant 0 : index
      %c0_11 = arith.constant 0 : index
      %17 = vector.load %arg7[%c0_10, %c0_11] : memref<128x128xf32, #tpu.memory_space<vmem>>, vector<128x128xf32>
      tpu.vector_store %arg7[%c0_10, %c0_11], %16 {strides = array<i32>} : memref<128x128xf32, #tpu.memory_space<vmem>>, vector<128x128xf32>,
    } else {
    }
    %c0 = arith.constant 0 : index
    %c0_1 = arith.constant 0 : index
    %3 = vector.load %arg2[%c0, %c0_1] : memref<128x256xi8, #tpu.memory_space<vmem>>, vector<128x256xi8>
    %4 = arith.sitofp %3 : vector<128x256xi8> to vector<128x256xbf16>
    %c256_i32 = arith.constant 256 : i32
    %5 = arith.muli %arg1, %c256_i32 : i32
    %6 = tpu.assume_multiple %5, 128 : i32
    %7 = arith.index_cast %6 : i32 to index
    %c0_2 = arith.constant 0 : index
    %8 = vector.load %arg3[%7, %c0_2] : memref<256x128xbf16, #tpu.memory_space<vmem>>, vector<256x128xbf16>
    %c0_3 = arith.constant 0 : index
    %c0_4 = arith.constant 0 : index
    %9 = vector.load %arg7[%c0_3, %c0_4] : memref<128x128xf32, #tpu.memory_space<vmem>>, vector<128x128xf32>
    %cst = arith.constant dense<0.000000e+00> : vector<128x128xf32>
    %10 = tpu.matmul %4, %8, %cst {dimension_numbers = #tpu.dot_dimension_numbers<[1], [0], [0], [1], [0, 0, 1, 1], [], []>} : vector<128x256xbf16>, vector<256x128xbf16>, vector<128x128xf32> -> vector<128x128xf32>
    %11 = arith.addf %9, %10 : vector<128x128xf32>
    %c0_5 = arith.constant 0 : index
    %c0_6 = arith.constant 0 : index
    %12 = vector.load %arg7[%c0_5, %c0_6] : memref<128x128xf32, #tpu.memory_space<vmem>>, vector<128x128xf32>
    tpu.vector_store %arg7[%c0_5, %c0_6], %11 {strides = array<i32>} : memref<128x128xf32, #tpu.memory_space<vmem>>, vector<128x128xf32>,
    %c0_i32_7 = arith.constant 0 : i32
    %13 = arith.cmpi eq, %arg1, %c0_i32_7 : i32
    %14 = arith.extui %13 : i1 to i32
    %c0_i32_8 = arith.constant 0 : i32
    %15 = arith.cmpi ne, %14, %c0_i32_8 : i32
    scf.if %15 {
      %c0_9 = arith.constant 0 : index
      %c0_10 = arith.constant 0 : index
      %16 = vector.load %arg7[%c0_9, %c0_10] : memref<128x128xf32, #tpu.memory_space<vmem>>, vector<128x128xf32>
      %c0_11 = arith.constant 0 : index
      %c0_12 = arith.constant 0 : index
      %17 = vector.load %arg4[%c0_11, %c0_12] : memref<128x1xf32, #tpu.memory_space<vmem>>, vector<128x1xf32>
      %18 = vector.broadcast %17 : vector<128x1xf32> to vector<128x128xf32>
      %19 = arith.mulf %16, %18 : vector<128x128xf32>
      %c0_13 = arith.constant 0 : index
      %c0_14 = arith.constant 0 : index
      %20 = vector.load %arg5[%c0_13, %c0_14] : memref<1x128xf32, #tpu.memory_space<vmem>>, vector<1x128xf32>
      %21 = vector.broadcast %20 : vector<1x128xf32> to vector<128x128xf32>
      %22 = arith.addf %19, %21 : vector<128x128xf32>
      %23 = arith.mulf %22, %22 : vector<128x128xf32>
      %cst_15 = arith.constant dense<0.000000e+00> : vector<128xf32>
      %24 = vector.multi_reduction <add>, %23, %cst_15 [1] : vector<128x128xf32> to vector<128xf32>
      %25 = vector.shape_cast %24 : vector<128xf32> to vector<128x1xf32>
      %cst_16 = arith.constant 9.99999996E-13 : f32
      %26 = vector.broadcast %cst_16 : f32 to vector<128x1xf32>
      %27 = arith.maximumf %25, %26 : vector<128x1xf32>
      %28 = math.rsqrt %27 : vector<128x1xf32>
      %29 = vector.broadcast %28 : vector<128x1xf32> to vector<128x128xf32>
      %30 = arith.mulf %22, %29 : vector<128x128xf32>
      %c0_17 = arith.constant 0 : index
      %c0_18 = arith.constant 0 : index
      %31 = vector.load %arg6[%c0_17, %c0_18] : memref<128x128xf32, #tpu.memory_space<vmem>>, vector<128x128xf32>
      tpu.vector_store %arg6[%c0_17, %c0_18], %30 {strides = array<i32>} : memref<128x128xf32, #tpu.memory_space<vmem>>, vector<128x128xf32>,
    } else {
    }
    return
  }
  func.func @transform_0(%arg0: i32, %arg1: i32) -> (i32, i32) {
    %c0_i32 = arith.constant 0 : i32
    return %arg0, %arg1 : i32, i32
  }
  func.func @transform_1(%arg0: i32, %arg1: i32) -> (i32, i32) {
    %c0_i32 = arith.constant 0 : i32
    %c0_i32_0 = arith.constant 0 : i32
    %c0_i32_1 = arith.constant 0 : i32
    return %c0_i32, %c0_i32_0 : i32, i32
  }
  func.func @transform_2(%arg0: i32, %arg1: i32) -> (i32, i32) {
    %c0_i32 = arith.constant 0 : i32
    %c0_i32_0 = arith.constant 0 : i32
    return %arg0, %c0_i32 : i32, i32
  }
  func.func @transform_3(%arg0: i32, %arg1: i32) -> (i32, i32) {
    %c0_i32 = arith.constant 0 : i32
    %c0_i32_0 = arith.constant 0 : i32
    %c0_i32_1 = arith.constant 0 : i32
    return %c0_i32, %c0_i32_0 : i32, i32
  }
  func.func @transform_4(%arg0: i32, %arg1: i32) -> (i32, i32) {
    %c0_i32 = arith.constant 0 : i32
    %c0_i32_0 = arith.constant 0 : i32
    return %arg0, %c0_i32 : i32, i32
  }
}

</mosaic_0001>

<llo_original>
// kernel: encoder_forward.2
$region0: #{encoder_forward.2}
  #allocation0 [shape = 'u32[]', space=smem, size = 0x4, offset = 0x4, fixed_abs, tag = 'smem constant byte address 0x4 - core index']
  #allocation1 [shape = 'u32[72,128]{1,0:T(1,128)}', space=vmem, size = 0x9000, scoped, tag = 'internal scratch']
  %s0 = inlined_call_operand.vmem [shape: f32[256,128], index: 0, kind: input, shape index: {}]
  %s1 = inlined_call_operand.vmem [shape: f32[128,128], index: 1, kind: input, shape index: {}]
  %s2 = inlined_call_operand.vmem [shape: f32[256,1], index: 2, kind: input, shape index: {}]
  %s3 = inlined_call_operand.vmem [shape: bf16[256,128], index: 3, kind: output, shape index: {}]
  %s4 = sld [smem:[#allocation0]]
  $region45: #{encoder_forward.2} parent=0
    _
  %s6 = ssub.s32 1, %s4
  %s7 = scalar_select 0, %s6, %s4
  loop: start=0, step=1, limit=4
  $region2: #{encoder_forward.2} parent=0 // loop_pre_header
    _
  $region3: #{encoder_forward.2} parent=0 // loop_header
    %s9 = sphi 0, %s13
    %p10 = scmp.ge.s32.totalorder %s9, 4
    %s19 = sphi 0, %s21
    %s22 = sphi 0, %s19
    %s23 = sphi 0, %s22
    %s39 = sphi 0, %s23
    %s43 = sphi 0, %s43
    %s45 = sphi 0, %s43
    %s46 = sphi 0, %s45
    %s60 = sphi 0, %s46
    %s66 = sphi 0, %s68
    %s69 = sphi 0, %s66
    %s70 = sphi 0, %s69
    %s86 = sphi 0, %s70
    %s92 = sphi 0, %s94
    %s95 = sphi 0, %s92
    %s96 = sphi 0, %s95
    %s112 = sphi 0, %s96
  $region4: #{encoder_forward.2} parent=0 // loop_header_branch
    %12 = sbr.rel (%p10) target = $region8
  $region5: #{encoder_forward.2} parent=0 // loop_body
    %s14 = ssub.s32 %s9, 1
    %s15 = ssub.s32 %s9, 2
    %s16 = sadd.s32 %s9, 1
    %s17 = ssub.s32 %s9, %s16
    %p18 = scmp.eq.s32.totalorder %s17, 0
    %s20 = sadd.s32 %s19, 1
    %s21 = scalar_select %p18, %s19, %s20
    %p24 = pneg %p18
    %p25 = scmp.eq.s32.totalorder %s9, 1
    %p26 = por %p24, %p25
    %p27 = scmp.ne.s32.totalorder %s19, %s22
    %p28 = scmp.eq.s32.totalorder %s9, 0
    %p29 = por %p27, %p28
    %p30 = scmp.ne.s32.totalorder %s19, %s22
    %p31 = scmp.eq.s32.totalorder %s14, 1
    %p32 = por %p30, %p31
    %p33 = scmp.ne.s32.totalorder %s22, %s23
    %p34 = scmp.eq.s32.totalorder %s14, 0
    %p35 = por %p33, %p34
    %p36 = scmp.ne.s32.totalorder %s22, %s23
    %p37 = scmp.eq.s32.totalorder %s15, 1
    %p38 = por %p36, %p37
    %p40 = scmp.ne.s32.totalorder %s23, %s39
    %p41 = scmp.eq.s32.totalorder %s15, 0
    %p42 = por %p40, %p41
    %s44 = sadd.s32 %s43, 1
    %p47 = scmp.eq.s32.totalorder %s9, 1
    %p48 = scmp.ne.s32.totalorder %s43, %s45
    %p49 = scmp.eq.s32.totalorder %s9, 0
    %p50 = por %p48, %p49
    %p51 = scmp.ne.s32.totalorder %s43, %s45
    %p52 = scmp.eq.s32.totalorder %s14, 1
    %p53 = por %p51, %p52
    %p54 = scmp.ne.s32.totalorder %s45, %s46
    %p55 = scmp.eq.s32.totalorder %s14, 0
    %p56 = por %p54, %p55
    %p57 = scmp.ne.s32.totalorder %s45, %s46
    %p58 = scmp.eq.s32.totalorder %s15, 1
    %p59 = por %p57, %p58
    %p61 = scmp.ne.s32.totalorder %s46, %s60
    %p62 = scmp.eq.s32.totalorder %s15, 0
    %p63 = por %p61, %p62
    %s64 = ssub.s32 %s9, %s16
    %p65 = scmp.eq.s32.totalorder %s64, 0
    %s67 = sadd.s32 %s66, 1
    %s68 = scalar_select %p65, %s66, %s67
    %p71 = pneg %p65
    %p72 = scmp.eq.s32.totalorder %s9, 1
    %p73 = por %p71, %p72
    %p74 = scmp.ne.s32.totalorder %s66, %s69
    %p75 = scmp.eq.s32.totalorder %s9, 0
    %p76 = por %p74, %p75
    %p77 = scmp.ne.s32.totalorder %s66, %s69
    %p78 = scmp.eq.s32.totalorder %s14, 1
    %p79 = por %p77, %p78
    %p80 = scmp.ne.s32.totalorder %s69, %s70
    %p81 = scmp.eq.s32.totalorder %s14, 0
    %p82 = por %p80, %p81
    %p83 = scmp.ne.s32.totalorder %s69, %s70
    %p84 = scmp.eq.s32.totalorder %s15, 1
    %p85 = por %p83, %p84
    %p87 = scmp.ne.s32.totalorder %s70, %s86
    %p88 = scmp.eq.s32.totalorder %s15, 0
    %p89 = por %p87, %p88
    %s90 = ssub.s32 %s9, %s16
    %p91 = scmp.eq.s32.totalorder %s90, 0
    %s93 = sadd.s32 %s92, 1
    %s94 = scalar_select %p91, %s92, %s93
    %p97 = pneg %p91
    %p98 = scmp.eq.s32.totalorder %s9, 1
    %p99 = por %p97, %p98
    %p100 = scmp.ne.s32.totalorder %s92, %s95
    %p101 = scmp.eq.s32.totalorder %s9, 0
    %p102 = por %p100, %p101
    %p103 = scmp.ne.s32.totalorder %s92, %s95
    %p104 = scmp.eq.s32.totalorder %s14, 1
    %p105 = por %p103, %p104
    %p106 = scmp.ne.s32.totalorder %s95, %s96
    %p107 = scmp.eq.s32.totalorder %s14, 0
    %p108 = por %p106, %p107
    %p109 = scmp.ne.s32.totalorder %s95, %s96
    %p110 = scmp.eq.s32.totalorder %s15, 1
    %p111 = por %p109, %p110
    %p113 = scmp.ne.s32.totalorder %s96, %s112
    %p114 = scmp.eq.s32.totalorder %s15, 0
    %p115 = por %p113, %p114
    %p116 = scmp.le.s32.totalorder 1, %s9
    %p117 = scmp.lt.s32.totalorder %s9, 3
    %p118 = pnand %p116, %p117
    %p119 = pneg %p118
    // Predicated region
    $region9: #{encoder_forward.2} parent=5 // pred_check
      _
    $region10: #{encoder_forward.2} parent=5 // pred_check_branch
      %121 = sbr.rel (%p118) target = $region12
    $region11: #{encoder_forward.2} parent=5 // pred_region
      %s122 = ssub.s32 %s9, 1
      // Predicated region
      $region13: #{encoder_forward.2} parent=11 // pred_check
        %p123 = pneg %p56
      $region14: #{encoder_forward.2} parent=11 // pred_check_branch
        %125 = sbr.rel (%p123) target = $region16
      $region15: #{encoder_forward.2} parent=11 // pred_region
        _
      $region16: #{encoder_forward.2} parent=11 // pred_fallthru
        _
    $region12: #{encoder_forward.2} parent=5 // pred_fallthru
      _
    %p126 = scmp.lt.s32.totalorder %s9, 2
    // Predicated region
    $region17: #{encoder_forward.2} parent=5 // pred_check
      %p127 = pneg %p126
    $region18: #{encoder_forward.2} parent=5 // pred_check_branch
      %129 = sbr.rel (%p127) target = $region20
    $region19: #{encoder_forward.2} parent=5 // pred_region
      // Predicated region
      $region21: #{encoder_forward.2} parent=19 // pred_check
        %p130 = pneg %p29
      $region22: #{encoder_forward.2} parent=19 // pred_check_branch
        %132 = sbr.rel (%p130) target = $region24
      $region23: #{encoder_forward.2} parent=19 // pred_region
        %s133 = smul.u32 16, %s9
        %p134 = scmp.lt.s32.totalorder %s133, 31
        %s135 = scalar_select %p134, %s133, 31
        %s136 = smul.addr %s135, 8
        %s137 = scalar_lea.vmem %s0, %s136
        %s138 = smul.u32 16, %s9
      $region24: #{encoder_forward.2} parent=19 // pred_fallthru
        _
      // Predicated region
      $region25: #{encoder_forward.2} parent=19 // pred_check
        %p139 = pneg %p76
      $region26: #{encoder_forward.2} parent=19 // pred_check_branch
        %141 = sbr.rel (%p139) target = $region28
      $region27: #{encoder_forward.2} parent=19 // pred_region
        %s142 = smul.u32 16, %s9
        %p143 = scmp.lt.s32.totalorder %s142, 31
        %s144 = scalar_select %p143, %s142, 31
        %s145 = smul.addr %s144, 8
        %s146 = scalar_lea.vmem %s2, %s145
        %s147 = smul.u32 16, %s9
      $region28: #{encoder_forward.2} parent=19 // pred_fallthru
        _
    $region20: #{encoder_forward.2} parent=5 // pred_fallthru
      _
    %p148 = scmp.le.s32.totalorder 1, %s9
    %p149 = scmp.lt.s32.totalorder %s9, 3
    %p150 = pnand %p148, %p149
    %p151 = pneg %p150
    // Predicated region
    $region29: #{encoder_forward.2} parent=5 // pred_check
      _
    $region30: #{encoder_forward.2} parent=5 // pred_check_branch
      %153 = sbr.rel (%p150) target = $region32
    $region31: #{encoder_forward.2} parent=5 // pred_region
      %s154 = ssub.s32 %s9, 1
      %s155 = smul.u32 16, %s14
      %p156 = scmp.lt.s32.totalorder %s155, 31
      %s157 = scalar_select %p156, %s155, 31
      %s158 = smul.addr %s157, 8
      %s159 = scalar_lea.vmem %s0, %s158
      %p160 = pneg %p35
      %p161 = pneg %p32
      %p162 = pneg %p56
      %p163 = pneg %p53
      %s164 = smul.u32 16, %s14
      %p165 = scmp.lt.s32.totalorder %s164, 31
      %s166 = scalar_select %p165, %s164, 31
      %s167 = smul.addr %s166, 8
      %s168 = scalar_lea.vmem %s2, %s167
      %p169 = pneg %p82
      %p170 = pneg %p79
      %p171 = pneg %p108
      %p172 = pneg %p105
      %s173 = smul.u32 16, %s14
      %p174 = scmp.lt.s32.totalorder %s173, 31
      %s175 = scalar_select %p174, %s173, 31
      %s176 = smul.addr %s175, 4
      %s177 = scalar_lea.vmem %s3, %s176
      %s178 = smul.u32 16, %s14
      %p179 = scmp.lt.s32.totalorder %s178, 31
      %s180 = scalar_select %p179, %s178, 31
      %s181 = smul.addr %s180, 8
      %s182 = scalar_lea.vmem %s0, %s181
      %s183 = smul.u32 16, %s14
      %s184 = smul.u32 16, %s14
      %p185 = scmp.lt.s32.totalorder %s184, 31
      %s186 = scalar_select %p185, %s184, 31
      %s187 = smul.addr %s186, 8
      %s188 = scalar_lea.vmem %s2, %s187
      %s189 = smul.u32 16, %s14
      %s190 = smul.u32 16, %s14
      %p191 = scmp.lt.s32.totalorder %s190, 31
      %s192 = scalar_select %p191, %s190, 31
      %s193 = smul.addr %s192, 4
      %s194 = scalar_lea.vmem %s3, %s193
      %s195 = smul.u32 16, %s14
      %v196 = vld [vmem:[%s182] sm:$0xff]
      %v197 = vld [vmem:[%s182 + $0x8] sm:$0xff]
      %v198 = vld [vmem:[%s182 + $0x10] sm:$0xff]
      %v199 = vld [vmem:[%s182 + $0x18] sm:$0xff]
      %v200 = vld [vmem:[%s182 + $0x20] sm:$0xff]
      %v201 = vld [vmem:[%s182 + $0x28] sm:$0xff]
      %v202 = vld [vmem:[%s182 + $0x30] sm:$0xff]
      %v203 = vld [vmem:[%s182 + $0x38] sm:$0xff]
      %v204 = vld [vmem:[%s182 + $0x40] sm:$0xff]
      %v205 = vld [vmem:[%s182 + $0x48] sm:$0xff]
      %v206 = vld [vmem:[%s182 + $0x50] sm:$0xff]
      %v207 = vld [vmem:[%s182 + $0x58] sm:$0xff]
      %v208 = vld [vmem:[%s182 + $0x60] sm:$0xff]
      %v209 = vld [vmem:[%s182 + $0x68] sm:$0xff]
      %v210 = vld [vmem:[%s182 + $0x70] sm:$0xff]
      %v211 = vld [vmem:[%s182 + $0x78] sm:$0xff]
      %v212 = vld [vmem:[%s1] sm:$0xff]
      %v213 = vld [vmem:[%s1 + $0x8] sm:$0xff]
      %v214 = vld [vmem:[%s1 + $0x10] sm:$0xff]
      %v215 = vld [vmem:[%s1 + $0x18] sm:$0xff]
      %v216 = vld [vmem:[%s1 + $0x20] sm:$0xff]
      %v217 = vld [vmem:[%s1 + $0x28] sm:$0xff]
      %v218 = vld [vmem:[%s1 + $0x30] sm:$0xff]
      %v219 = vld [vmem:[%s1 + $0x38] sm:$0xff]
      %v220 = vld [vmem:[%s1 + $0x40] sm:$0xff]
      %v221 = vld [vmem:[%s1 + $0x48] sm:$0xff]
      %v222 = vld [vmem:[%s1 + $0x50] sm:$0xff]
      %v223 = vld [vmem:[%s1 + $0x58] sm:$0xff]
      %v224 = vld [vmem:[%s1 + $0x60] sm:$0xff]
      %v225 = vld [vmem:[%s1 + $0x68] sm:$0xff]
      %v226 = vld [vmem:[%s1 + $0x70] sm:$0xff]
      %v227 = vld [vmem:[%s1 + $0x78] sm:$0xff]
      %228 = vmatpush.msra.mxu0 %v227
      %229 = vmatpush.msra.mxu0 %v226
      %230 = vmatpush.msra.mxu0 %v225
      %231 = vmatpush.msra.mxu0 %v224
      %232 = vmatpush.msra.mxu0 %v223
      %233 = vmatpush.msra.mxu0 %v222
      %234 = vmatpush.msra.mxu0 %v221
      %235 = vmatpush.msra.mxu0 %v220
      %236 = vmatpush.msra.mxu0 %v219
      %237 = vmatpush.msra.mxu0 %v218
      %238 = vmatpush.msra.mxu0 %v217
      %239 = vmatpush.msra.mxu0 %v216
      %240 = vmatpush.msra.mxu0 %v215
      %241 = vmatpush.msra.mxu0 %v214
      %242 = vmatpush.msra.mxu0 %v213
      %243 = vmatpush.msra.mxu0 %v212
      %244 = vmatmul.f32.gmra.mxu0 %v196
      %v245 = vpop.f32.mrf.mxu0
      %v246 = vadd.f32 0.0, %v245
      %247 = vmatmul.f32.gmra.mxu0 %v197
      %v248 = vpop.f32.mrf.mxu0
      %v249 = vadd.f32 0.0, %v248
      %250 = vmatmul.f32.gmra.mxu0 %v198
      %v251 = vpop.f32.mrf.mxu0
      %v252 = vadd.f32 0.0, %v251
      %253 = vmatmul.f32.gmra.mxu0 %v199
      %v254 = vpop.f32.mrf.mxu0
      %v255 = vadd.f32 0.0, %v254
      %256 = vmatmul.f32.gmra.mxu0 %v200
      %v257 = vpop.f32.mrf.mxu0
      %v258 = vadd.f32 0.0, %v257
      %259 = vmatmul.f32.gmra.mxu0 %v201
      %v260 = vpop.f32.mrf.mxu0
      %v261 = vadd.f32 0.0, %v260
      %262 = vmatmul.f32.gmra.mxu0 %v202
      %v263 = vpop.f32.mrf.mxu0
      %v264 = vadd.f32 0.0, %v263
      %265 = vmatmul.f32.gmra.mxu0 %v203
      %v266 = vpop.f32.mrf.mxu0
      %v267 = vadd.f32 0.0, %v266
      %268 = vmatmul.f32.gmra.mxu0 %v204
      %v269 = vpop.f32.mrf.mxu0
      %v270 = vadd.f32 0.0, %v269
      %271 = vmatmul.f32.gmra.mxu0 %v205
      %v272 = vpop.f32.mrf.mxu0
      %v273 = vadd.f32 0.0, %v272
      %274 = vmatmul.f32.gmra.mxu0 %v206
      %v275 = vpop.f32.mrf.mxu0
      %v276 = vadd.f32 0.0, %v275
      %277 = vmatmul.f32.gmra.mxu0 %v207
      %v278 = vpop.f32.mrf.mxu0
      %v279 = vadd.f32 0.0, %v278
      %280 = vmatmul.f32.gmra.mxu0 %v208
      %v281 = vpop.f32.mrf.mxu0
      %v282 = vadd.f32 0.0, %v281
      %283 = vmatmul.f32.gmra.mxu0 %v209
      %v284 = vpop.f32.mrf.mxu0
      %v285 = vadd.f32 0.0, %v284
      %286 = vmatmul.f32.gmra.mxu0 %v210
      %v287 = vpop.f32.mrf.mxu0
      %v288 = vadd.f32 0.0, %v287
      %289 = vmatmul.f32.gmra.mxu0 %v211
      %v290 = vpop.f32.mrf.mxu0
      %v291 = vadd.f32 0.0, %v290
      %292 = vdwg.mxu0
      %v293 = vld [vmem:[%s188] sm:$0xff]
      %v294 = vld [vmem:[%s188 + $0x8] sm:$0xff]
      %v295 = vld [vmem:[%s188 + $0x10] sm:$0xff]
      %v296 = vld [vmem:[%s188 + $0x18] sm:$0xff]
      %v297 = vld [vmem:[%s188 + $0x20] sm:$0xff]
      %v298 = vld [vmem:[%s188 + $0x28] sm:$0xff]
      %v299 = vld [vmem:[%s188 + $0x30] sm:$0xff]
      %v300 = vld [vmem:[%s188 + $0x38] sm:$0xff]
      %v301 = vld [vmem:[%s188 + $0x40] sm:$0xff]
      %v302 = vld [vmem:[%s188 + $0x48] sm:$0xff]
      %v303 = vld [vmem:[%s188 + $0x50] sm:$0xff]
      %v304 = vld [vmem:[%s188 + $0x58] sm:$0xff]
      %v305 = vld [vmem:[%s188 + $0x60] sm:$0xff]
      %v306 = vld [vmem:[%s188 + $0x68] sm:$0xff]
      %v307 = vld [vmem:[%s188 + $0x70] sm:$0xff]
      %v308 = vld [vmem:[%s188 + $0x78] sm:$0xff]
      %310 = vset.pattern.permute.xlu0 0
      %311 = vperm.xlu0 %310, %v293
      %v312 = vpop.permute.xlu0 %311
      %315 = vset.pattern.permute.xlu0 0
      %316 = vperm.xlu0 %315, %v294
      %v317 = vpop.permute.xlu0 %316
      %320 = vset.pattern.permute.xlu0 0
      %321 = vperm.xlu0 %320, %v295
      %v322 = vpop.permute.xlu0 %321
      %325 = vset.pattern.permute.xlu0 0
      %326 = vperm.xlu0 %325, %v296
      %v327 = vpop.permute.xlu0 %326
      %330 = vset.pattern.permute.xlu0 0
      %331 = vperm.xlu0 %330, %v297
      %v332 = vpop.permute.xlu0 %331
      %335 = vset.pattern.permute.xlu0 0
      %336 = vperm.xlu0 %335, %v298
      %v337 = vpop.permute.xlu0 %336
      %340 = vset.pattern.permute.xlu0 0
      %341 = vperm.xlu0 %340, %v299
      %v342 = vpop.permute.xlu0 %341
      %345 = vset.pattern.permute.xlu0 0
      %346 = vperm.xlu0 %345, %v300
      %v347 = vpop.permute.xlu0 %346
      %350 = vset.pattern.permute.xlu0 0
      %351 = vperm.xlu0 %350, %v301
      %v352 = vpop.permute.xlu0 %351
      %355 = vset.pattern.permute.xlu0 0
      %356 = vperm.xlu0 %355, %v302
      %v357 = vpop.permute.xlu0 %356
      %360 = vset.pattern.permute.xlu0 0
      %361 = vperm.xlu0 %360, %v303
      %v362 = vpop.permute.xlu0 %361
      %365 = vset.pattern.permute.xlu0 0
      %366 = vperm.xlu0 %365, %v304
      %v367 = vpop.permute.xlu0 %366
      %370 = vset.pattern.permute.xlu0 0
      %371 = vperm.xlu0 %370, %v305
      %v372 = vpop.permute.xlu0 %371
      %375 = vset.pattern.permute.xlu0 0
      %376 = vperm.xlu0 %375, %v306
      %v377 = vpop.permute.xlu0 %376
      %380 = vset.pattern.permute.xlu0 0
      %381 = vperm.xlu0 %380, %v307
      %v382 = vpop.permute.xlu0 %381
      %385 = vset.pattern.permute.xlu0 0
      %386 = vperm.xlu0 %385, %v308
      %v387 = vpop.permute.xlu0 %386
      %v389 = vmul.f32 %v246, %v312
      %v390 = vmul.f32 %v249, %v317
      %v391 = vmul.f32 %v252, %v322
      %v392 = vmul.f32 %v255, %v327
      %v393 = vmul.f32 %v258, %v332
      %v394 = vmul.f32 %v261, %v337
      %v395 = vmul.f32 %v264, %v342
      %v396 = vmul.f32 %v267, %v347
      %v397 = vmul.f32 %v270, %v352
      %v398 = vmul.f32 %v273, %v357
      %v399 = vmul.f32 %v276, %v362
      %v400 = vmul.f32 %v279, %v367
      %v401 = vmul.f32 %v282, %v372
      %v402 = vmul.f32 %v285, %v377
      %v403 = vmul.f32 %v288, %v382
      %v404 = vmul.f32 %v291, %v387
      %v405 = vpack.c.bf16 %v389, %v389
      %v406 = vpack.c.bf16 %v390, %v390
      %v407 = vpack.c.bf16 %v391, %v391
      %v408 = vpack.c.bf16 %v392, %v392
      %v409 = vpack.c.bf16 %v393, %v393
      %v410 = vpack.c.bf16 %v394, %v394
      %v411 = vpack.c.bf16 %v395, %v395
      %v412 = vpack.c.bf16 %v396, %v396
      %v413 = vpack.c.bf16 %v397, %v397
      %v414 = vpack.c.bf16 %v398, %v398
      %v415 = vpack.c.bf16 %v399, %v399
      %v416 = vpack.c.bf16 %v400, %v400
      %v417 = vpack.c.bf16 %v401, %v401
      %v418 = vpack.c.bf16 %v402, %v402
      %v419 = vpack.c.bf16 %v403, %v403
      %v420 = vpack.c.bf16 %v404, %v404
      %421 = vst [vmem:[%s194] sm:$0xf] %v405
      %422 = vst [vmem:[%s194 + $0x4] sm:$0xf] %v406
      %423 = vst [vmem:[%s194 + $0x8] sm:$0xf] %v407
      %424 = vst [vmem:[%s194 + $0xc] sm:$0xf] %v408
      %425 = vst [vmem:[%s194 + $0x10] sm:$0xf] %v409
      %426 = vst [vmem:[%s194 + $0x14] sm:$0xf] %v410
      %427 = vst [vmem:[%s194 + $0x18] sm:$0xf] %v411
      %428 = vst [vmem:[%s194 + $0x1c] sm:$0xf] %v412
      %429 = vst [vmem:[%s194 + $0x20] sm:$0xf] %v413
      %430 = vst [vmem:[%s194 + $0x24] sm:$0xf] %v414
      %431 = vst [vmem:[%s194 + $0x28] sm:$0xf] %v415
      %432 = vst [vmem:[%s194 + $0x2c] sm:$0xf] %v416
      %433 = vst [vmem:[%s194 + $0x30] sm:$0xf] %v417
      %434 = vst [vmem:[%s194 + $0x34] sm:$0xf] %v418
      %435 = vst [vmem:[%s194 + $0x38] sm:$0xf] %v419
      %436 = vst [vmem:[%s194 + $0x3c] sm:$0xf] %v420
      %s437 = smul.u32 16, %s14
      %p438 = scmp.lt.s32.totalorder %s437, 31
      %s439 = scalar_select %p438, %s437, 31
      %s440 = smul.addr %s439, 4
      %s441 = scalar_lea.vmem %s3, %s440
      // Predicated region
      $region33: #{encoder_forward.2} parent=31 // pred_check
        %p442 = pneg %p105
      $region34: #{encoder_forward.2} parent=31 // pred_check_branch
        %444 = sbr.rel (%p442) target = $region36
      $region35: #{encoder_forward.2} parent=31 // pred_region
        %s445 = smul.u32 16, %s14
      $region36: #{encoder_forward.2} parent=31 // pred_fallthru
        _
    $region32: #{encoder_forward.2} parent=5 // pred_fallthru
      _
    %p446 = scmp.le.s32.totalorder 2, %s9
    // Predicated region
    $region37: #{encoder_forward.2} parent=5 // pred_check
      %p447 = pneg %p446
    $region38: #{encoder_forward.2} parent=5 // pred_check_branch
      %449 = sbr.rel (%p447) target = $region40
    $region39: #{encoder_forward.2} parent=5 // pred_region
      %s450 = ssub.s32 %s9, 2
      // Predicated region
      $region41: #{encoder_forward.2} parent=39 // pred_check
        %p451 = pneg %p111
      $region42: #{encoder_forward.2} parent=39 // pred_check_branch
        %453 = sbr.rel (%p451) target = $region44
      $region43: #{encoder_forward.2} parent=39 // pred_region
        %s454 = smul.u32 16, %s15
        %p455 = scmp.lt.s32.totalorder %s454, 31
        %s456 = scalar_select %p455, %s454, 31
        %s457 = smul.addr %s456, 4
        %s458 = scalar_lea.vmem %s3, %s457
      $region44: #{encoder_forward.2} parent=39 // pred_fallthru
        _
    $region40: #{encoder_forward.2} parent=5 // pred_fallthru
      _
  $region6: #{encoder_forward.2} parent=0 // loop_footer
    %s13 = sadd.s32 1, %s9
  $region7: #{encoder_forward.2} parent=0 // loop_footer_branch
    %8 = sbr.rel target = $region3
  $region8: #{encoder_forward.2} parent=0 // loop_exit
    _

// kernel: encoder_forward.3
$region0: #{encoder_forward.3}
  #allocation0 [shape = 'u32[]', space=smem, size = 0x4, offset = 0x4, fixed_abs, tag = 'smem constant byte address 0x4 - core index']
  #allocation1 [shape = 'u32[72,128]{1,0:T(1,128)}', space=vmem, size = 0x9000, scoped, tag = 'internal scratch']
  #allocation2 [shape = 'f32[128,128]{1,0:T(8,128)}', space=vmem, size = 0x10000, scoped, tag = 'scratch operand']
  %s0 = inlined_call_operand.vmem [shape: s8[256,256], index: 0, kind: input, shape index: {}]
  %s1 = inlined_call_operand.vmem [shape: bf16[256,128], index: 1, kind: input, shape index: {}]
  %s2 = inlined_call_operand.vmem [shape: f32[256,1], index: 2, kind: input, shape index: {}]
  %s3 = inlined_call_operand.vmem [shape: f32[1,128], index: 3, kind: input, shape index: {}]
  %s4 = inlined_call_operand.vmem [shape: f32[256,128], index: 4, kind: output, shape index: {}]
  %s5 = sld [smem:[#allocation0]]
  $region57: #{encoder_forward.3} parent=0
    _
  %s7 = ssub.s32 1, %s5
  %s8 = scalar_select 0, %s7, %s5
  loop: start=0, step=1, limit=4
  $region2: #{encoder_forward.3} parent=0 // loop_pre_header
    _
  $region3: #{encoder_forward.3} parent=0 // loop_header
    %s10 = sphi 0, %s14
    %p11 = scmp.ge.s32.totalorder %s10, 4
    %s17 = sphi 0, %s29
    %s18 = sphi 0, %s25
    %s19 = sphi 0, %s17
    %s20 = sphi 0, %s18
    %s21 = sphi 0, %s19
    %s22 = sphi 0, %s20
    %s34 = sphi 0, %s36
    %s37 = sphi 0, %s34
    %s38 = sphi 0, %s37
    %s54 = sphi 0, %s38
    %s58 = sphi 0, %s58
    %s60 = sphi 0, %s58
    %s61 = sphi 0, %s60
    %s75 = sphi 0, %s61
    %s81 = sphi 0, %s83
    %s84 = sphi 0, %s81
    %s85 = sphi 0, %s84
    %s101 = sphi 0, %s85
    %s105 = sphi 0, %s105
    %s107 = sphi 0, %s105
    %s108 = sphi 0, %s107
    %s122 = sphi 0, %s108
    %s128 = sphi 0, %s130
    %s131 = sphi 0, %s128
    %s132 = sphi 0, %s131
    %s148 = sphi 0, %s132
  $region4: #{encoder_forward.3} parent=0 // loop_header_branch
    %13 = sbr.rel (%p11) target = $region8
  $region5: #{encoder_forward.3} parent=0 // loop_body
    %s15 = ssub.s32 %s10, 1
    %s16 = ssub.s32 %s10, 2
    %s23 = sadd.s32 1, %s18
    %p24 = scmp.ge.s32.totalorder %s23, 1
    %s25 = scalar_select %p24, 0, %s23
    %s26 = sadd.s32 1, %s17
    %s27 = scalar_select %p24, %s26, %s17
    %p28 = scmp.ge.s32.totalorder %s27, 2
    %s29 = scalar_select %p28, 0, %s27
    %s30 = ssub.s32 %s17, %s29
    %s31 = ssub.s32 %s18, %s25
    %s32 = sor.u32 %s30, %s31
    %p33 = scmp.eq.s32.totalorder %s32, 0
    %s35 = sadd.s32 %s34, 1
    %s36 = scalar_select %p33, %s34, %s35
    %p39 = pneg %p33
    %p40 = scmp.eq.s32.totalorder %s10, 1
    %p41 = por %p39, %p40
    %p42 = scmp.ne.s32.totalorder %s34, %s37
    %p43 = scmp.eq.s32.totalorder %s10, 0
    %p44 = por %p42, %p43
    %p45 = scmp.ne.s32.totalorder %s34, %s37
    %p46 = scmp.eq.s32.totalorder %s15, 1
    %p47 = por %p45, %p46
    %p48 = scmp.ne.s32.totalorder %s37, %s38
    %p49 = scmp.eq.s32.totalorder %s15, 0
    %p50 = por %p48, %p49
    %p51 = scmp.ne.s32.totalorder %s37, %s38
    %p52 = scmp.eq.s32.totalorder %s16, 1
    %p53 = por %p51, %p52
    %p55 = scmp.ne.s32.totalorder %s38, %s54
    %p56 = scmp.eq.s32.totalorder %s16, 0
    %p57 = por %p55, %p56
    %s59 = sadd.s32 %s58, 1
    %p62 = scmp.eq.s32.totalorder %s10, 1
    %p63 = scmp.ne.s32.totalorder %s58, %s60
    %p64 = scmp.eq.s32.totalorder %s10, 0
    %p65 = por %p63, %p64
    %p66 = scmp.ne.s32.totalorder %s58, %s60
    %p67 = scmp.eq.s32.totalorder %s15, 1
    %p68 = por %p66, %p67
    %p69 = scmp.ne.s32.totalorder %s60, %s61
    %p70 = scmp.eq.s32.totalorder %s15, 0
    %p71 = por %p69, %p70
    %p72 = scmp.ne.s32.totalorder %s60, %s61
    %p73 = scmp.eq.s32.totalorder %s16, 1
    %p74 = por %p72, %p73
    %p76 = scmp.ne.s32.totalorder %s61, %s75
    %p77 = scmp.eq.s32.totalorder %s16, 0
    %p78 = por %p76, %p77
    %s79 = ssub.s32 %s17, %s29
    %p80 = scmp.eq.s32.totalorder %s79, 0
    %s82 = sadd.s32 %s81, 1
    %s83 = scalar_select %p80, %s81, %s82
    %p86 = pneg %p80
    %p87 = scmp.eq.s32.totalorder %s10, 1
    %p88 = por %p86, %p87
    %p89 = scmp.ne.s32.totalorder %s81, %s84
    %p90 = scmp.eq.s32.totalorder %s10, 0
    %p91 = por %p89, %p90
    %p92 = scmp.ne.s32.totalorder %s81, %s84
    %p93 = scmp.eq.s32.totalorder %s15, 1
    %p94 = por %p92, %p93
    %p95 = scmp.ne.s32.totalorder %s84, %s85
    %p96 = scmp.eq.s32.totalorder %s15, 0
    %p97 = por %p95, %p96
    %p98 = scmp.ne.s32.totalorder %s84, %s85
    %p99 = scmp.eq.s32.totalorder %s16, 1
    %p100 = por %p98, %p99
    %p102 = scmp.ne.s32.totalorder %s85, %s101
    %p103 = scmp.eq.s32.totalorder %s16, 0
    %p104 = por %p102, %p103
    %s106 = sadd.s32 %s105, 1
    %p109 = scmp.eq.s32.totalorder %s10, 1
    %p110 = scmp.ne.s32.totalorder %s105, %s107
    %p111 = scmp.eq.s32.totalorder %s10, 0
    %p112 = por %p110, %p111
    %p113 = scmp.ne.s32.totalorder %s105, %s107
    %p114 = scmp.eq.s32.totalorder %s15, 1
    %p115 = por %p113, %p114
    %p116 = scmp.ne.s32.totalorder %s107, %s108
    %p117 = scmp.eq.s32.totalorder %s15, 0
    %p118 = por %p116, %p117
    %p119 = scmp.ne.s32.totalorder %s107, %s108
    %p120 = scmp.eq.s32.totalorder %s16, 1
    %p121 = por %p119, %p120
    %p123 = scmp.ne.s32.totalorder %s108, %s122
    %p124 = scmp.eq.s32.totalorder %s16, 0
    %p125 = por %p123, %p124
    %s126 = ssub.s32 %s17, %s29
    %p127 = scmp.eq.s32.totalorder %s126, 0
    %s129 = sadd.s32 %s128, 1
    %s130 = scalar_select %p127, %s128, %s129
    %p133 = pneg %p127
    %p134 = scmp.eq.s32.totalorder %s10, 1
    %p135 = por %p133, %p134
    %p136 = scmp.ne.s32.totalorder %s128, %s131
    %p137 = scmp.eq.s32.totalorder %s10, 0
    %p138 = por %p136, %p137
    %p139 = scmp.ne.s32.totalorder %s128, %s131
    %p140 = scmp.eq.s32.totalorder %s15, 1
    %p141 = por %p139, %p140
    %p142 = scmp.ne.s32.totalorder %s131, %s132
    %p143 = scmp.eq.s32.totalorder %s15, 0
    %p144 = por %p142, %p143
    %p145 = scmp.ne.s32.totalorder %s131, %s132
    %p146 = scmp.eq.s32.totalorder %s16, 1
    %p147 = por %p145, %p146
    %p149 = scmp.ne.s32.totalorder %s132, %s148
    %p150 = scmp.eq.s32.totalorder %s16, 0
    %p151 = por %p149, %p150
    %p152 = scmp.le.s32.totalorder 1, %s10
    %p153 = scmp.lt.s32.totalorder %s10, 3
    %p154 = pnand %p152, %p153
    %p155 = pneg %p154
    // Predicated region
    $region9: #{encoder_forward.3} parent=5 // pred_check
      _
    $region10: #{encoder_forward.3} parent=5 // pred_check_branch
      %157 = sbr.rel (%p154) target = $region12
    $region11: #{encoder_forward.3} parent=5 // pred_region
      %s158 = ssub.s32 %s10, 1
      // Predicated region
      $region13: #{encoder_forward.3} parent=11 // pred_check
        %p159 = pneg %p71
      $region14: #{encoder_forward.3} parent=11 // pred_check_branch
        %161 = sbr.rel (%p159) target = $region16
      $region15: #{encoder_forward.3} parent=11 // pred_region
        _
      $region16: #{encoder_forward.3} parent=11 // pred_fallthru
        _
      // Predicated region
      $region17: #{encoder_forward.3} parent=11 // pred_check
        %p162 = pneg %p118
      $region18: #{encoder_forward.3} parent=11 // pred_check_branch
        %164 = sbr.rel (%p162) target = $region20
      $region19: #{encoder_forward.3} parent=11 // pred_region
        _
      $region20: #{encoder_forward.3} parent=11 // pred_fallthru
        _
    $region12: #{encoder_forward.3} parent=5 // pred_fallthru
      _
    %p165 = scmp.lt.s32.totalorder %s10, 2
    // Predicated region
    $region21: #{encoder_forward.3} parent=5 // pred_check
      %p166 = pneg %p165
    $region22: #{encoder_forward.3} parent=5 // pred_check_branch
      %168 = sbr.rel (%p166) target = $region24
    $region23: #{encoder_forward.3} parent=5 // pred_region
      // Predicated region
      $region25: #{encoder_forward.3} parent=23 // pred_check
        %p169 = pneg %p44
      $region26: #{encoder_forward.3} parent=23 // pred_check_branch
        %171 = sbr.rel (%p169) target = $region28
      $region27: #{encoder_forward.3} parent=23 // pred_region
        %s172 = smul.u32 4, %s17
        %s173 = smul.u32 2, %s18
        %p174 = scmp.lt.s32.totalorder %s172, 7
        %s175 = scalar_select %p174, %s172, 7
        %p176 = scmp.lt.s32.totalorder %s173, 1
        %s177 = scalar_select %p176, %s173, 1
        %s178 = smul.addr %s175, 2
        %s179 = sadd.s32 %s177, %s178
        %s180 = smul.addr %s179, 8
        %s181 = scalar_lea.vmem %s0, %s180
        %s182 = smul.u32 4, %s17
        %s183 = smul.u32 2, %s18
      $region28: #{encoder_forward.3} parent=23 // pred_fallthru
        _
      // Predicated region
      $region29: #{encoder_forward.3} parent=23 // pred_check
        %p184 = pneg %p91
      $region30: #{encoder_forward.3} parent=23 // pred_check_branch
        %186 = sbr.rel (%p184) target = $region32
      $region31: #{encoder_forward.3} parent=23 // pred_region
        %s187 = smul.u32 16, %s17
        %p188 = scmp.lt.s32.totalorder %s187, 31
        %s189 = scalar_select %p188, %s187, 31
        %s190 = smul.addr %s189, 8
        %s191 = scalar_lea.vmem %s2, %s190
        %s192 = smul.u32 16, %s17
      $region32: #{encoder_forward.3} parent=23 // pred_fallthru
        _
    $region24: #{encoder_forward.3} parent=5 // pred_fallthru
      _
    %p193 = scmp.le.s32.totalorder 1, %s10
    %p194 = scmp.lt.s32.totalorder %s10, 3
    %p195 = pnand %p193, %p194
    %p196 = pneg %p195
    // Predicated region
    $region33: #{encoder_forward.3} parent=5 // pred_check
      _
    $region34: #{encoder_forward.3} parent=5 // pred_check_branch
      %198 = sbr.rel (%p195) target = $region36
    $region35: #{encoder_forward.3} parent=5 // pred_region
      %s199 = ssub.s32 %s10, 1
      %s200 = smul.u32 4, %s19
      %s201 = smul.u32 2, %s20
      %p202 = scmp.lt.s32.totalorder %s200, 7
      %s203 = scalar_select %p202, %s200, 7
      %p204 = scmp.lt.s32.totalorder %s201, 1
      %s205 = scalar_select %p204, %s201, 1
      %s206 = smul.addr %s203, 2
      %s207 = sadd.s32 %s205, %s206
      %s208 = smul.addr %s207, 8
      %s209 = scalar_lea.vmem %s0, %s208
      %p210 = pneg %p50
      %p211 = pneg %p47
      %p212 = pneg %p71
      %p213 = pneg %p68
      %s214 = smul.u32 16, %s19
      %p215 = scmp.lt.s32.totalorder %s214, 31
      %s216 = scalar_select %p215, %s214, 31
      %s217 = smul.addr %s216, 8
      %s218 = scalar_lea.vmem %s2, %s217
      %p219 = pneg %p97
      %p220 = pneg %p94
      %p221 = pneg %p118
      %p222 = pneg %p115
      %p223 = pneg %p144
      %p224 = pneg %p141
      %s225 = smul.u32 16, %s19
      %p226 = scmp.lt.s32.totalorder %s225, 31
      %s227 = scalar_select %p226, %s225, 31
      %s228 = smul.addr %s227, 8
      %s229 = scalar_lea.vmem %s4, %s228
      %s230 = smul.u32 4, %s19
      %s231 = smul.u32 2, %s20
      %p232 = scmp.lt.s32.totalorder %s230, 7
      %s233 = scalar_select %p232, %s230, 7
      %p234 = scmp.lt.s32.totalorder %s231, 1
      %s235 = scalar_select %p234, %s231, 1
      %s236 = smul.addr %s233, 2
      %s237 = sadd.s32 %s235, %s236
      %s238 = smul.addr %s237, 8
      %s239 = scalar_lea.vmem %s0, %s238
      %s240 = smul.u32 4, %s19
      %s241 = smul.u32 2, %s20
      %s242 = smul.u32 16, %s19
      %p243 = scmp.lt.s32.totalorder %s242, 31
      %s244 = scalar_select %p243, %s242, 31
      %s245 = smul.addr %s244, 8
      %s246 = scalar_lea.vmem %s2, %s245
      %s247 = smul.u32 16, %s19
      %s248 = smul.u32 16, %s19
      %p249 = scmp.lt.s32.totalorder %s248, 31
      %s250 = scalar_select %p249, %s248, 31
      %s251 = smul.addr %s250, 8
      %s252 = scalar_lea.vmem %s4, %s251
      %s253 = smul.u32 16, %s19
      %p254 = scmp.eq.s32.totalorder %s20, 0
      // Predicated region
      $region37: #{encoder_forward.3} parent=35 // pred_check
        %p255 = pneg %p254
      $region38: #{encoder_forward.3} parent=35 // pred_check_branch
        %257 = sbr.rel (%p255) target = $region40
      $region39: #{encoder_forward.3} parent=35 // pred_region
        %258 = vst [vmem:[#allocation2] sm:$0xff] 0.0
        %259 = vst [vmem:[#allocation2 + $0x8] sm:$0xff] 0.0
        %260 = vst [vmem:[#allocation2 + $0x10] sm:$0xff] 0.0
        %261 = vst [vmem:[#allocation2 + $0x18] sm:$0xff] 0.0
        %262 = vst [vmem:[#allocation2 + $0x20] sm:$0xff] 0.0
        %263 = vst [vmem:[#allocation2 + $0x28] sm:$0xff] 0.0
        %264 = vst [vmem:[#allocation2 + $0x30] sm:$0xff] 0.0
        %265 = vst [vmem:[#allocation2 + $0x38] sm:$0xff] 0.0
        %266 = vst [vmem:[#allocation2 + $0x40] sm:$0xff] 0.0
        %267 = vst [vmem:[#allocation2 + $0x48] sm:$0xff] 0.0
        %268 = vst [vmem:[#allocation2 + $0x50] sm:$0xff] 0.0
        %269 = vst [vmem:[#allocation2 + $0x58] sm:$0xff] 0.0
        %270 = vst [vmem:[#allocation2 + $0x60] sm:$0xff] 0.0
        %271 = vst [vmem:[#allocation2 + $0x68] sm:$0xff] 0.0
        %272 = vst [vmem:[#allocation2 + $0x70] sm:$0xff] 0.0
        %273 = vst [vmem:[#allocation2 + $0x78] sm:$0xff] 0.0
      $region40: #{encoder_forward.3} parent=35 // pred_fallthru
        _
      %v274 = vld [vmem:[%s239] sm:$0xff]
      %v275 = vld [vmem:[%s239 + $0x8] sm:$0xff]
      %v276 = vld [vmem:[%s239 + $0x10] sm:$0xff]
      %v277 = vld [vmem:[%s239 + $0x18] sm:$0xff]
      %v278 = vld [vmem:[%s239 + $0x20] sm:$0xff]
      %v279 = vld [vmem:[%s239 + $0x28] sm:$0xff]
      %v280 = vld [vmem:[%s239 + $0x30] sm:$0xff]
      %v281 = vld [vmem:[%s239 + $0x38] sm:$0xff]
      %v282 = vunpack.c.0.s8 %v274
      %v283 = vunpack.c.0.s8 %v275
      %v284 = vunpack.c.1.s8 %v274
      %v285 = vunpack.c.1.s8 %v275
      %v286 = vunpack.c.2.s8 %v274
      %v287 = vunpack.c.2.s8 %v275
      %v288 = vunpack.c.3.s8 %v274
      %v289 = vunpack.c.3.s8 %v275
      %v290 = vunpack.c.0.s8 %v276
      %v291 = vunpack.c.0.s8 %v277
      %v292 = vunpack.c.1.s8 %v276
      %v293 = vunpack.c.1.s8 %v277
      %v294 = vunpack.c.2.s8 %v276
      %v295 = vunpack.c.2.s8 %v277
      %v296 = vunpack.c.3.s8 %v276
      %v297 = vunpack.c.3.s8 %v277
      %v298 = vunpack.c.0.s8 %v278
      %v299 = vunpack.c.0.s8 %v279
      %v300 = vunpack.c.1.s8 %v278
      %v301 = vunpack.c.1.s8 %v279
      %v302 = vunpack.c.2.s8 %v278
      %v303 = vunpack.c.2.s8 %v279
      %v304 = vunpack.c.3.s8 %v278
      %v305 = vunpack.c.3.s8 %v279
      %v306 = vunpack.c.0.s8 %v280
      %v307 = vunpack.c.0.s8 %v281
      %v308 = vunpack.c.1.s8 %v280
      %v309 = vunpack.c.1.s8 %v281
      %v310 = vunpack.c.2.s8 %v280
      %v311 = vunpack.c.2.s8 %v281
      %v312 = vunpack.c.3.s8 %v280
      %v313 = vunpack.c.3.s8 %v281
      %v314 = vcvt.s32.f32 %v282
      %v315 = vcvt.s32.f32 %v283
      %v316 = vcvt.s32.f32 %v284
      %v317 = vcvt.s32.f32 %v285
      %v318 = vcvt.s32.f32 %v286
      %v319 = vcvt.s32.f32 %v287
      %v320 = vcvt.s32.f32 %v288
      %v321 = vcvt.s32.f32 %v289
      %v322 = vcvt.s32.f32 %v290
      %v323 = vcvt.s32.f32 %v291
      %v324 = vcvt.s32.f32 %v292
      %v325 = vcvt.s32.f32 %v293
      %v326 = vcvt.s32.f32 %v294
      %v327 = vcvt.s32.f32 %v295
      %v328 = vcvt.s32.f32 %v296
      %v329 = vcvt.s32.f32 %v297
      %v330 = vcvt.s32.f32 %v298
      %v331 = vcvt.s32.f32 %v299
      %v332 = vcvt.s32.f32 %v300
      %v333 = vcvt.s32.f32 %v301
      %v334 = vcvt.s32.f32 %v302
      %v335 = vcvt.s32.f32 %v303
      %v336 = vcvt.s32.f32 %v304
      %v337 = vcvt.s32.f32 %v305
      %v338 = vcvt.s32.f32 %v306
      %v339 = vcvt.s32.f32 %v307
      %v340 = vcvt.s32.f32 %v308
      %v341 = vcvt.s32.f32 %v309
      %v342 = vcvt.s32.f32 %v310
      %v343 = vcvt.s32.f32 %v311
      %v344 = vcvt.s32.f32 %v312
      %v345 = vcvt.s32.f32 %v313
      %v346 = vpack.c.bf16 %v316, %v314
      %v347 = vpack.c.bf16 %v317, %v315
      %v348 = vpack.c.bf16 %v320, %v318
      %v349 = vpack.c.bf16 %v321, %v319
      %v350 = vpack.c.bf16 %v324, %v322
      %v351 = vpack.c.bf16 %v325, %v323
      %v352 = vpack.c.bf16 %v328, %v326
      %v353 = vpack.c.bf16 %v329, %v327
      %v354 = vpack.c.bf16 %v332, %v330
      %v355 = vpack.c.bf16 %v333, %v331
      %v356 = vpack.c.bf16 %v336, %v334
      %v357 = vpack.c.bf16 %v337, %v335
      %v358 = vpack.c.bf16 %v340, %v338
      %v359 = vpack.c.bf16 %v341, %v339
      %v360 = vpack.c.bf16 %v344, %v342
      %v361 = vpack.c.bf16 %v345, %v343
      %s362 = smul.u32 %s20, 256
      %s363 = sshra.s32 %s362, 3
      %s364 = sand.u32 %s362, 7
      %s365 = smul.addr %s363, 4
      %s366 = scalar_lea.vmem %s1, %s365
      %v367 = vld [vmem:[%s366] sm:$0xf]
      %v368 = vld [vmem:[%s366 + $0x4] sm:$0xf]
      %v369 = vld [vmem:[%s366 + $0x8] sm:$0xf]
      %v370 = vld [vmem:[%s366 + $0xc] sm:$0xf]
      %v371 = vld [vmem:[%s366 + $0x10] sm:$0xf]
      %v372 = vld [vmem:[%s366 + $0x14] sm:$0xf]
      %v373 = vld [vmem:[%s366 + $0x18] sm:$0xf]
      %v374 = vld [vmem:[%s366 + $0x1c] sm:$0xf]
      %v375 = vld [vmem:[%s366 + $0x20] sm:$0xf]
      %v376 = vld [vmem:[%s366 + $0x24] sm:$0xf]
      %v377 = vld [vmem:[%s366 + $0x28] sm:$0xf]
      %v378 = vld [vmem:[%s366 + $0x2c] sm:$0xf]
      %v379 = vld [vmem:[%s366 + $0x30] sm:$0xf]
      %v380 = vld [vmem:[%s366 + $0x34] sm:$0xf]
      %v381 = vld [vmem:[%s366 + $0x38] sm:$0xf]
      %v382 = vld [vmem:[%s366 + $0x3c] sm:$0xf]
      %v383 = vld [vmem:[%s366 + $0x40] sm:$0xf]
      %v384 = vld [vmem:[%s366 + $0x44] sm:$0xf]
      %v385 = vld [vmem:[%s366 + $0x48] sm:$0xf]
      %v386 = vld [vmem:[%s366 + $0x4c] sm:$0xf]
      %v387 = vld [vmem:[%s366 + $0x50] sm:$0xf]
      %v388 = vld [vmem:[%s366 + $0x54] sm:$0xf]
      %v389 = vld [vmem:[%s366 + $0x58] sm:$0xf]
      %v390 = vld [vmem:[%s366 + $0x5c] sm:$0xf]
      %v391 = vld [vmem:[%s366 + $0x60] sm:$0xf]
      %v392 = vld [vmem:[%s366 + $0x64] sm:$0xf]
      %v393 = vld [vmem:[%s366 + $0x68] sm:$0xf]
      %v394 = vld [vmem:[%s366 + $0x6c] sm:$0xf]
      %v395 = vld [vmem:[%s366 + $0x70] sm:$0xf]
      %v396 = vld [vmem:[%s366 + $0x74] sm:$0xf]
      %v397 = vld [vmem:[%s366 + $0x78] sm:$0xf]
      %v398 = vld [vmem:[%s366 + $0x7c] sm:$0xf]
      %v399 = vld [vmem:[#allocation2] sm:$0xff]
      %v400 = vld [vmem:[#allocation2 + $0x8] sm:$0xff]
      %v401 = vld [vmem:[#allocation2 + $0x10] sm:$0xff]
      %v402 = vld [vmem:[#allocation2 + $0x18] sm:$0xff]
      %v403 = vld [vmem:[#allocation2 + $0x20] sm:$0xff]
      %v404 = vld [vmem:[#allocation2 + $0x28] sm:$0xff]
      %v405 = vld [vmem:[#allocation2 + $0x30] sm:$0xff]
      %v406 = vld [vmem:[#allocation2 + $0x38] sm:$0xff]
      %v407 = vld [vmem:[#allocation2 + $0x40] sm:$0xff]
      %v408 = vld [vmem:[#allocation2 + $0x48] sm:$0xff]
      %v409 = vld [vmem:[#allocation2 + $0x50] sm:$0xff]
      %v410 = vld [vmem:[#allocation2 + $0x58] sm:$0xff]
      %v411 = vld [vmem:[#allocation2 + $0x60] sm:$0xff]
      %v412 = vld [vmem:[#allocation2 + $0x68] sm:$0xff]
      %v413 = vld [vmem:[#allocation2 + $0x70] sm:$0xff]
      %v414 = vld [vmem:[#allocation2 + $0x78] sm:$0xff]
      %v447 = vunpack.c.l.b16 %v367
      %v448 = vunpack.c.l.b16 %v368
      %v449 = vunpack.c.l.b16 %v369
      %v450 = vunpack.c.l.b16 %v370
      %v451 = vunpack.c.l.b16 %v371
      %v452 = vunpack.c.l.b16 %v372
      %v453 = vunpack.c.l.b16 %v373
      %v454 = vunpack.c.l.b16 %v374
      %v455 = vunpack.c.l.b16 %v375
      %v456 = vunpack.c.l.b16 %v376
      %v457 = vunpack.c.l.b16 %v377
      %v458 = vunpack.c.l.b16 %v378
      %v459 = vunpack.c.l.b16 %v379
      %v460 = vunpack.c.l.b16 %v380
      %v461 = vunpack.c.l.b16 %v381
      %v462 = vunpack.c.l.b16 %v382
      %v463 = vunpack.c.l.b16 %v383
      %v464 = vunpack.c.l.b16 %v384
      %v465 = vunpack.c.l.b16 %v385
      %v466 = vunpack.c.l.b16 %v386
      %v467 = vunpack.c.l.b16 %v387
      %v468 = vunpack.c.l.b16 %v388
      %v469 = vunpack.c.l.b16 %v389
      %v470 = vunpack.c.l.b16 %v390
      %v471 = vunpack.c.l.b16 %v391
      %v472 = vunpack.c.l.b16 %v392
      %v473 = vunpack.c.l.b16 %v393
      %v474 = vunpack.c.l.b16 %v394
      %v475 = vunpack.c.l.b16 %v395
      %v476 = vunpack.c.l.b16 %v396
      %v477 = vunpack.c.l.b16 %v397
      %v478 = vunpack.c.l.b16 %v398
      %v479 = vpack.c.b16 %v448, %v447
      %v480 = vpack.c.b16 %v450, %v449
      %v481 = vpack.c.b16 %v452, %v451
      %v482 = vpack.c.b16 %v454, %v453
      %v483 = vpack.c.b16 %v456, %v455
      %v484 = vpack.c.b16 %v458, %v457
      %v485 = vpack.c.b16 %v460, %v459
      %v486 = vpack.c.b16 %v462, %v461
      %v487 = vpack.c.b16 %v464, %v463
      %v488 = vpack.c.b16 %v466, %v465
      %v489 = vpack.c.b16 %v468, %v467
      %v490 = vpack.c.b16 %v470, %v469
      %v491 = vpack.c.b16 %v472, %v471
      %v492 = vpack.c.b16 %v474, %v473
      %v493 = vpack.c.b16 %v476, %v475
      %v494 = vpack.c.b16 %v478, %v477
      %511 = vmatpush.bf16.msra.mxu0 %v486
      %512 = vmatpush.bf16.msra.mxu0 %v485
      %513 = vmatpush.bf16.msra.mxu0 %v484
      %514 = vmatpush.bf16.msra.mxu0 %v483
      %515 = vmatpush.bf16.msra.mxu0 %v482
      %516 = vmatpush.bf16.msra.mxu0 %v481
      %517 = vmatpush.bf16.msra.mxu0 %v480
      %518 = vmatpush.bf16.msra.mxu0 %v479
      %519 = vmatmul.bf16.gmra.mxu0 %v346
      %v520 = vpop.f32.mrf.mxu0
      %v521 = vadd.f32 0.0, %v520
      %v522 = vpop.f32.mrf.mxu0
      %v523 = vadd.f32 0.0, %v522
      %524 = vmatmul.bf16.gmra.mxu0 %v348
      %v525 = vpop.f32.mrf.mxu0
      %v526 = vadd.f32 0.0, %v525
      %v527 = vpop.f32.mrf.mxu0
      %v528 = vadd.f32 0.0, %v527
      %529 = vmatmul.bf16.gmra.mxu0 %v350
      %v530 = vpop.f32.mrf.mxu0
      %v531 = vadd.f32 0.0, %v530
      %v532 = vpop.f32.mrf.mxu0
      %v533 = vadd.f32 0.0, %v532
      %534 = vmatmul.bf16.gmra.mxu0 %v352
      %v535 = vpop.f32.mrf.mxu0
      %v536 = vadd.f32 0.0, %v535
      %v537 = vpop.f32.mrf.mxu0
      %v538 = vadd.f32 0.0, %v537
      %539 = vmatmul.bf16.gmra.mxu0 %v354
      %v540 = vpop.f32.mrf.mxu0
      %v541 = vadd.f32 0.0, %v540
      %v542 = vpop.f32.mrf.mxu0
      %v543 = vadd.f32 0.0, %v542
      %544 = vmatmul.bf16.gmra.mxu0 %v356
      %v545 = vpop.f32.mrf.mxu0
      %v546 = vadd.f32 0.0, %v545
      %v547 = vpop.f32.mrf.mxu0
      %v548 = vadd.f32 0.0, %v547
      %549 = vmatmul.bf16.gmra.mxu0 %v358
      %v550 = vpop.f32.mrf.mxu0
      %v551 = vadd.f32 0.0, %v550
      %v552 = vpop.f32.mrf.mxu0
      %v553 = vadd.f32 0.0, %v552
      %554 = vmatmul.bf16.gmra.mxu0 %v360
      %v555 = vpop.f32.mrf.mxu0
      %v556 = vadd.f32 0.0, %v555
      %v557 = vpop.f32.mrf.mxu0
      %v558 = vadd.f32 0.0, %v557
      %559 = vdwg.mxu0
      %560 = vmatpush.bf16.msra.mxu0 %v494
      %561 = vmatpush.bf16.msra.mxu0 %v493
      %562 = vmatpush.bf16.msra.mxu0 %v492
      %563 = vmatpush.bf16.msra.mxu0 %v491
      %564 = vmatpush.bf16.msra.mxu0 %v490
      %565 = vmatpush.bf16.msra.mxu0 %v489
      %566 = vmatpush.bf16.msra.mxu0 %v488
      %567 = vmatpush.bf16.msra.mxu0 %v487
      %568 = vmatmul.bf16.gmra.mxu0 %v347
      %v569 = vpop.f32.mrf.mxu0
      %v570 = vadd.f32 %v521, %v569
      %v571 = vpop.f32.mrf.mxu0
      %v572 = vadd.f32 %v523, %v571
      %573 = vmatmul.bf16.gmra.mxu0 %v349
      %v574 = vpop.f32.mrf.mxu0
      %v575 = vadd.f32 %v526, %v574
      %v576 = vpop.f32.mrf.mxu0
      %v577 = vadd.f32 %v528, %v576
      %578 = vmatmul.bf16.gmra.mxu0 %v351
      %v579 = vpop.f32.mrf.mxu0
      %v580 = vadd.f32 %v531, %v579
      %v581 = vpop.f32.mrf.mxu0
      %v582 = vadd.f32 %v533, %v581
      %583 = vmatmul.bf16.gmra.mxu0 %v353
      %v584 = vpop.f32.mrf.mxu0
      %v585 = vadd.f32 %v536, %v584
      %v586 = vpop.f32.mrf.mxu0
      %v587 = vadd.f32 %v538, %v586
      %588 = vmatmul.bf16.gmra.mxu0 %v355
      %v589 = vpop.f32.mrf.mxu0
      %v590 = vadd.f32 %v541, %v589
      %v591 = vpop.f32.mrf.mxu0
      %v592 = vadd.f32 %v543, %v591
      %593 = vmatmul.bf16.gmra.mxu0 %v357
      %v594 = vpop.f32.mrf.mxu0
      %v595 = vadd.f32 %v546, %v594
      %v596 = vpop.f32.mrf.mxu0
      %v597 = vadd.f32 %v548, %v596
      %598 = vmatmul.bf16.gmra.mxu0 %v359
      %v599 = vpop.f32.mrf.mxu0
      %v600 = vadd.f32 %v551, %v599
      %v601 = vpop.f32.mrf.mxu0
      %v602 = vadd.f32 %v553, %v601
      %603 = vmatmul.bf16.gmra.mxu0 %v361
      %v604 = vpop.f32.mrf.mxu0
      %v605 = vadd.f32 %v556, %v604
      %v606 = vpop.f32.mrf.mxu0
      %v607 = vadd.f32 %v558, %v606
      %608 = vdwg.mxu0
      %v609 = vadd.f32 %v399, %v570
      %v610 = vadd.f32 %v400, %v572
      %v611 = vadd.f32 %v401, %v575
      %v612 = vadd.f32 %v402, %v577
      %v613 = vadd.f32 %v403, %v580
      %v614 = vadd.f32 %v404, %v582
      %v615 = vadd.f32 %v405, %v585
      %v616 = vadd.f32 %v406, %v587
      %v617 = vadd.f32 %v407, %v590
      %v618 = vadd.f32 %v408, %v592
      %v619 = vadd.f32 %v409, %v595
      %v620 = vadd.f32 %v410, %v597
      %v621 = vadd.f32 %v411, %v600
      %v622 = vadd.f32 %v412, %v602
      %v623 = vadd.f32 %v413, %v605
      %v624 = vadd.f32 %v414, %v607
      %625 = vst [vmem:[#allocation2] sm:$0xff] %v609
      %626 = vst [vmem:[#allocation2 + $0x8] sm:$0xff] %v610
      %627 = vst [vmem:[#allocation2 + $0x10] sm:$0xff] %v611
      %628 = vst [vmem:[#allocation2 + $0x18] sm:$0xff] %v612
      %629 = vst [vmem:[#allocation2 + $0x20] sm:$0xff] %v613
      %630 = vst [vmem:[#allocation2 + $0x28] sm:$0xff] %v614
      %631 = vst [vmem:[#allocation2 + $0x30] sm:$0xff] %v615
      %632 = vst [vmem:[#allocation2 + $0x38] sm:$0xff] %v616
      %633 = vst [vmem:[#allocation2 + $0x40] sm:$0xff] %v617
      %634 = vst [vmem:[#allocation2 + $0x48] sm:$0xff] %v618
      %635 = vst [vmem:[#allocation2 + $0x50] sm:$0xff] %v619
      %636 = vst [vmem:[#allocation2 + $0x58] sm:$0xff] %v620
      %637 = vst [vmem:[#allocation2 + $0x60] sm:$0xff] %v621
      %638 = vst [vmem:[#allocation2 + $0x68] sm:$0xff] %v622
      %639 = vst [vmem:[#allocation2 + $0x70] sm:$0xff] %v623
      %640 = vst [vmem:[#allocation2 + $0x78] sm:$0xff] %v624
      // Predicated region
      $region41: #{encoder_forward.3} parent=35 // pred_check
        %p641 = pneg %p254
      $region42: #{encoder_forward.3} parent=35 // pred_check_branch
        %643 = sbr.rel (%p641) target = $region44
      $region43: #{encoder_forward.3} parent=35 // pred_region
        %v644 = vld [vmem:[#allocation2] sm:$0xff]
        %v645 = vld [vmem:[#allocation2 + $0x8] sm:$0xff]
        %v646 = vld [vmem:[#allocation2 + $0x10] sm:$0xff]
        %v647 = vld [vmem:[#allocation2 + $0x18] sm:$0xff]
        %v648 = vld [vmem:[#allocation2 + $0x20] sm:$0xff]
        %v649 = vld [vmem:[#allocation2 + $0x28] sm:$0xff]
        %v650 = vld [vmem:[#allocation2 + $0x30] sm:$0xff]
        %v651 = vld [vmem:[#allocation2 + $0x38] sm:$0xff]
        %v652 = vld [vmem:[#allocation2 + $0x40] sm:$0xff]
        %v653 = vld [vmem:[#allocation2 + $0x48] sm:$0xff]
        %v654 = vld [vmem:[#allocation2 + $0x50] sm:$0xff]
        %v655 = vld [vmem:[#allocation2 + $0x58] sm:$0xff]
        %v656 = vld [vmem:[#allocation2 + $0x60] sm:$0xff]
        %v657 = vld [vmem:[#allocation2 + $0x68] sm:$0xff]
        %v658 = vld [vmem:[#allocation2 + $0x70] sm:$0xff]
        %v659 = vld [vmem:[#allocation2 + $0x78] sm:$0xff]
        %v660 = vld [vmem:[%s246] sm:$0xff]
        %v661 = vld [vmem:[%s246 + $0x8] sm:$0xff]
        %v662 = vld [vmem:[%s246 + $0x10] sm:$0xff]
        %v663 = vld [vmem:[%s246 + $0x18] sm:$0xff]
        %v664 = vld [vmem:[%s246 + $0x20] sm:$0xff]
        %v665 = vld [vmem:[%s246 + $0x28] sm:$0xff]
        %v666 = vld [vmem:[%s246 + $0x30] sm:$0xff]
        %v667 = vld [vmem:[%s246 + $0x38] sm:$0xff]
        %v668 = vld [vmem:[%s246 + $0x40] sm:$0xff]
        %v669 = vld [vmem:[%s246 + $0x48] sm:$0xff]
        %v670 = vld [vmem:[%s246 + $0x50] sm:$0xff]
        %v671 = vld [vmem:[%s246 + $0x58] sm:$0xff]
        %v672 = vld [vmem:[%s246 + $0x60] sm:$0xff]
        %v673 = vld [vmem:[%s246 + $0x68] sm:$0xff]
        %v674 = vld [vmem:[%s246 + $0x70] sm:$0xff]
        %v675 = vld [vmem:[%s246 + $0x78] sm:$0xff]
        %677 = vset.pattern.permute.xlu0 0
        %678 = vperm.xlu0 %677, %v660
        %v679 = vpop.permute.xlu0 %678
        %682 = vset.pattern.permute.xlu0 0
        %683 = vperm.xlu0 %682, %v661
        %v684 = vpop.permute.xlu0 %683
        %687 = vset.pattern.permute.xlu0 0
        %688 = vperm.xlu0 %687, %v662
        %v689 = vpop.permute.xlu0 %688
        %692 = vset.pattern.permute.xlu0 0
        %693 = vperm.xlu0 %692, %v663
        %v694 = vpop.permute.xlu0 %693
        %697 = vset.pattern.permute.xlu0 0
        %698 = vperm.xlu0 %697, %v664
        %v699 = vpop.permute.xlu0 %698
        %702 = vset.pattern.permute.xlu0 0
        %703 = vperm.xlu0 %702, %v665
        %v704 = vpop.permute.xlu0 %703
        %707 = vset.pattern.permute.xlu0 0
        %708 = vperm.xlu0 %707, %v666
        %v709 = vpop.permute.xlu0 %708
        %712 = vset.pattern.permute.xlu0 0
        %713 = vperm.xlu0 %712, %v667
        %v714 = vpop.permute.xlu0 %713
        %717 = vset.pattern.permute.xlu0 0
        %718 = vperm.xlu0 %717, %v668
        %v719 = vpop.permute.xlu0 %718
        %722 = vset.pattern.permute.xlu0 0
        %723 = vperm.xlu0 %722, %v669
        %v724 = vpop.permute.xlu0 %723
        %727 = vset.pattern.permute.xlu0 0
        %728 = vperm.xlu0 %727, %v670
        %v729 = vpop.permute.xlu0 %728
        %732 = vset.pattern.permute.xlu0 0
        %733 = vperm.xlu0 %732, %v671
        %v734 = vpop.permute.xlu0 %733
        %737 = vset.pattern.permute.xlu0 0
        %738 = vperm.xlu0 %737, %v672
        %v739 = vpop.permute.xlu0 %738
        %742 = vset.pattern.permute.xlu0 0
        %743 = vperm.xlu0 %742, %v673
        %v744 = vpop.permute.xlu0 %743
        %747 = vset.pattern.permute.xlu0 0
        %748 = vperm.xlu0 %747, %v674
        %v749 = vpop.permute.xlu0 %748
        %752 = vset.pattern.permute.xlu0 0
        %753 = vperm.xlu0 %752, %v675
        %v754 = vpop.permute.xlu0 %753
        %v756 = vmul.f32 %v644, %v679
        %v757 = vmul.f32 %v645, %v684
        %v758 = vmul.f32 %v646, %v689
        %v759 = vmul.f32 %v647, %v694
        %v760 = vmul.f32 %v648, %v699
        %v761 = vmul.f32 %v649, %v704
        %v762 = vmul.f32 %v650, %v709
        %v763 = vmul.f32 %v651, %v714
        %v764 = vmul.f32 %v652, %v719
        %v765 = vmul.f32 %v653, %v724
        %v766 = vmul.f32 %v654, %v729
        %v767 = vmul.f32 %v655, %v734
        %v768 = vmul.f32 %v656, %v739
        %v769 = vmul.f32 %v657, %v744
        %v770 = vmul.f32 %v658, %v749
        %v771 = vmul.f32 %v659, %v754
        %v772 = vld [vmem:[%s3] sm:$0x1]
        %v774 = vperm.slane %v772, 0
        %v776 = vadd.f32 %v756, %v774
        %v777 = vadd.f32 %v757, %v774
        %v778 = vadd.f32 %v758, %v774
        %v779 = vadd.f32 %v759, %v774
        %v780 = vadd.f32 %v760, %v774
        %v781 = vadd.f32 %v761, %v774
        %v782 = vadd.f32 %v762, %v774
        %v783 = vadd.f32 %v763, %v774
        %v784 = vadd.f32 %v764, %v774
        %v785 = vadd.f32 %v765, %v774
        %v786 = vadd.f32 %v766, %v774
        %v787 = vadd.f32 %v767, %v774
        %v788 = vadd.f32 %v768, %v774
        %v789 = vadd.f32 %v769, %v774
        %v790 = vadd.f32 %v770, %v774
        %v791 = vadd.f32 %v771, %v774
        %v792 = vmul.f32 %v776, %v776
        %v793 = vmul.f32 %v777, %v777
        %v794 = vmul.f32 %v778, %v778
        %v795 = vmul.f32 %v779, %v779
        %v796 = vmul.f32 %v780, %v780
        %v797 = vmul.f32 %v781, %v781
        %v798 = vmul.f32 %v782, %v782
        %v799 = vmul.f32 %v783, %v783
        %v800 = vmul.f32 %v784, %v784
        %v801 = vmul.f32 %v785, %v785
        %v802 = vmul.f32 %v786, %v786
        %v803 = vmul.f32 %v787, %v787
        %v804 = vmul.f32 %v788, %v788
        %v805 = vmul.f32 %v789, %v789
        %v806 = vmul.f32 %v790, %v790
        %v807 = vmul.f32 %v791, %v791
        %808 = vadd.xlane.f32.xlu0 %v792
        %v809 = vpop.xlane.xlu0 %808
        %810 = vadd.xlane.f32.xlu0 %v793
        %v811 = vpop.xlane.xlu0 %810
        %812 = vadd.xlane.f32.xlu0 %v794
        %v813 = vpop.xlane.xlu0 %812
        %814 = vadd.xlane.f32.xlu0 %v795
        %v815 = vpop.xlane.xlu0 %814
        %816 = vadd.xlane.f32.xlu0 %v796
        %v817 = vpop.xlane.xlu0 %816
        %818 = vadd.xlane.f32.xlu0 %v797
        %v819 = vpop.xlane.xlu0 %818
        %820 = vadd.xlane.f32.xlu0 %v798
        %v821 = vpop.xlane.xlu0 %820
        %822 = vadd.xlane.f32.xlu0 %v799
        %v823 = vpop.xlane.xlu0 %822
        %824 = vadd.xlane.f32.xlu0 %v800
        %v825 = vpop.xlane.xlu0 %824
        %826 = vadd.xlane.f32.xlu0 %v801
        %v827 = vpop.xlane.xlu0 %826
        %828 = vadd.xlane.f32.xlu0 %v802
        %v829 = vpop.xlane.xlu0 %828
        %830 = vadd.xlane.f32.xlu0 %v803
        %v831 = vpop.xlane.xlu0 %830
        %832 = vadd.xlane.f32.xlu0 %v804
        %v833 = vpop.xlane.xlu0 %832
        %834 = vadd.xlane.f32.xlu0 %v805
        %v835 = vpop.xlane.xlu0 %834
        %836 = vadd.xlane.f32.xlu0 %v806
        %v837 = vpop.xlane.xlu0 %836
        %838 = vadd.xlane.f32.xlu0 %v807
        %v839 = vpop.xlane.xlu0 %838
        %v840 = vmax.f32 %v809, 1e-12
        %v841 = vmax.f32 %v811, 1e-12
        %v842 = vmax.f32 %v813, 1e-12
        %v843 = vmax.f32 %v815, 1e-12
        %v844 = vmax.f32 %v817, 1e-12
        %v845 = vmax.f32 %v819, 1e-12
        %v846 = vmax.f32 %v821, 1e-12
        %v847 = vmax.f32 %v823, 1e-12
        %v848 = vmax.f32 %v825, 1e-12
        %v849 = vmax.f32 %v827, 1e-12
        %v850 = vmax.f32 %v829, 1e-12
        %v851 = vmax.f32 %v831, 1e-12
        %v852 = vmax.f32 %v833, 1e-12
        %v853 = vmax.f32 %v835, 1e-12
        %v854 = vmax.f32 %v837, 1e-12
        %v855 = vmax.f32 %v839, 1e-12
        %v856 = vrsqrt.pop %v840
        %v857 = vmul.f32 %v856, %v840
        %v858 = vmul.f32 %v857, %v856
        %v859 = vmul.f32 0.5, %v858
        %v860 = vsub.f32 1.5, %v859
        %v861 = vmul.f32 %v856, %v860
        %vm862 = vweird.f32 %v840
        %vm863 = vweird.f32 %v856
        %vm864 = vmor %vm862, %vm863
        %v865 = vsel %vm864, %v856, %v861
        %v866 = vrsqrt.pop %v841
        %v867 = vmul.f32 %v866, %v841
        %v868 = vmul.f32 %v867, %v866
        %v869 = vmul.f32 0.5, %v868
        %v870 = vsub.f32 1.5, %v869
        %v871 = vmul.f32 %v866, %v870
        %vm872 = vweird.f32 %v841
        %vm873 = vweird.f32 %v866
        %vm874 = vmor %vm872, %vm873
        %v875 = vsel %vm874, %v866, %v871
        %v876 = vrsqrt.pop %v842
        %v877 = vmul.f32 %v876, %v842
        %v878 = vmul.f32 %v877, %v876
        %v879 = vmul.f32 0.5, %v878
        %v880 = vsub.f32 1.5, %v879
        %v881 = vmul.f32 %v876, %v880
        %vm882 = vweird.f32 %v842
        %vm883 = vweird.f32 %v876
        %vm884 = vmor %vm882, %vm883
        %v885 = vsel %vm884, %v876, %v881
        %v886 = vrsqrt.pop %v843
        %v887 = vmul.f32 %v886, %v843
        %v888 = vmul.f32 %v887, %v886
        %v889 = vmul.f32 0.5, %v888
        %v890 = vsub.f32 1.5, %v889
        %v891 = vmul.f32 %v886, %v890
        %vm892 = vweird.f32 %v843
        %vm893 = vweird.f32 %v886
        %vm894 = vmor %vm892, %vm893
        %v895 = vsel %vm894, %v886, %v891
        %v896 = vrsqrt.pop %v844
        %v897 = vmul.f32 %v896, %v844
        %v898 = vmul.f32 %v897, %v896
        %v899 = vmul.f32 0.5, %v898
        %v900 = vsub.f32 1.5, %v899
        %v901 = vmul.f32 %v896, %v900
        %vm902 = vweird.f32 %v844
        %vm903 = vweird.f32 %v896
        %vm904 = vmor %vm902, %vm903
        %v905 = vsel %vm904, %v896, %v901
        %v906 = vrsqrt.pop %v845
        %v907 = vmul.f32 %v906, %v845
        %v908 = vmul.f32 %v907, %v906
        %v909 = vmul.f32 0.5, %v908
        %v910 = vsub.f32 1.5, %v909
        %v911 = vmul.f32 %v906, %v910
        %vm912 = vweird.f32 %v845
        %vm913 = vweird.f32 %v906
        %vm914 = vmor %vm912, %vm913
        %v915 = vsel %vm914, %v906, %v911
        %v916 = vrsqrt.pop %v846
        %v917 = vmul.f32 %v916, %v846
        %v918 = vmul.f32 %v917, %v916
        %v919 = vmul.f32 0.5, %v918
        %v920 = vsub.f32 1.5, %v919
        %v921 = vmul.f32 %v916, %v920
        %vm922 = vweird.f32 %v846
        %vm923 = vweird.f32 %v916
        %vm924 = vmor %vm922, %vm923
        %v925 = vsel %vm924, %v916, %v921
        %v926 = vrsqrt.pop %v847
        %v927 = vmul.f32 %v926, %v847
        %v928 = vmul.f32 %v927, %v926
        %v929 = vmul.f32 0.5, %v928
        %v930 = vsub.f32 1.5, %v929
        %v931 = vmul.f32 %v926, %v930
        %vm932 = vweird.f32 %v847
        %vm933 = vweird.f32 %v926
        %vm934 = vmor %vm932, %vm933
        %v935 = vsel %vm934, %v926, %v931
        %v936 = vrsqrt.pop %v848
        %v937 = vmul.f32 %v936, %v848
        %v938 = vmul.f32 %v937, %v936
        %v939 = vmul.f32 0.5, %v938
        %v940 = vsub.f32 1.5, %v939
        %v941 = vmul.f32 %v936, %v940
        %vm942 = vweird.f32 %v848
        %vm943 = vweird.f32 %v936
        %vm944 = vmor %vm942, %vm943
        %v945 = vsel %vm944, %v936, %v941
        %v946 = vrsqrt.pop %v849
        %v947 = vmul.f32 %v946, %v849
        %v948 = vmul.f32 %v947, %v946
        %v949 = vmul.f32 0.5, %v948
        %v950 = vsub.f32 1.5, %v949
        %v951 = vmul.f32 %v946, %v950
        %vm952 = vweird.f32 %v849
        %vm953 = vweird.f32 %v946
        %vm954 = vmor %vm952, %vm953
        %v955 = vsel %vm954, %v946, %v951
        %v956 = vrsqrt.pop %v850
        %v957 = vmul.f32 %v956, %v850
        %v958 = vmul.f32 %v957, %v956
        %v959 = vmul.f32 0.5, %v958
        %v960 = vsub.f32 1.5, %v959
        %v961 = vmul.f32 %v956, %v960
        %vm962 = vweird.f32 %v850
        %vm963 = vweird.f32 %v956
        %vm964 = vmor %vm962, %vm963
        %v965 = vsel %vm964, %v956, %v961
        %v966 = vrsqrt.pop %v851
        %v967 = vmul.f32 %v966, %v851
        %v968 = vmul.f32 %v967, %v966
        %v969 = vmul.f32 0.5, %v968
        %v970 = vsub.f32 1.5, %v969
        %v971 = vmul.f32 %v966, %v970
        %vm972 = vweird.f32 %v851
        %vm973 = vweird.f32 %v966
        %vm974 = vmor %vm972, %vm973
        %v975 = vsel %vm974, %v966, %v971
        %v976 = vrsqrt.pop %v852
        %v977 = vmul.f32 %v976, %v852
        %v978 = vmul.f32 %v977, %v976
        %v979 = vmul.f32 0.5, %v978
        %v980 = vsub.f32 1.5, %v979
        %v981 = vmul.f32 %v976, %v980
        %vm982 = vweird.f32 %v852
        %vm983 = vweird.f32 %v976
        %vm984 = vmor %vm982, %vm983
        %v985 = vsel %vm984, %v976, %v981
        %v986 = vrsqrt.pop %v853
        %v987 = vmul.f32 %v986, %v853
        %v988 = vmul.f32 %v987, %v986
        %v989 = vmul.f32 0.5, %v988
        %v990 = vsub.f32 1.5, %v989
        %v991 = vmul.f32 %v986, %v990
        %vm992 = vweird.f32 %v853
        %vm993 = vweird.f32 %v986
        %vm994 = vmor %vm992, %vm993
        %v995 = vsel %vm994, %v986, %v991
        %v996 = vrsqrt.pop %v854
        %v997 = vmul.f32 %v996, %v854
        %v998 = vmul.f32 %v997, %v996
        %v999 = vmul.f32 0.5, %v998
        %v1000 = vsub.f32 1.5, %v999
        %v1001 = vmul.f32 %v996, %v1000
        %vm1002 = vweird.f32 %v854
        %vm1003 = vweird.f32 %v996
        %vm1004 = vmor %vm1002, %vm1003
        %v1005 = vsel %vm1004, %v996, %v1001
        %v1006 = vrsqrt.pop %v855
        %v1007 = vmul.f32 %v1006, %v855
        %v1008 = vmul.f32 %v1007, %v1006
        %v1009 = vmul.f32 0.5, %v1008
        %v1010 = vsub.f32 1.5, %v1009
        %v1011 = vmul.f32 %v1006, %v1010
        %vm1012 = vweird.f32 %v855
        %vm1013 = vweird.f32 %v1006
        %vm1014 = vmor %vm1012, %vm1013
        %v1015 = vsel %vm1014, %v1006, %v1011
        %v1016 = vmul.f32 %v776, %v865
        %v1017 = vmul.f32 %v777, %v875
        %v1018 = vmul.f32 %v778, %v885
        %v1019 = vmul.f32 %v779, %v895
        %v1020 = vmul.f32 %v780, %v905
        %v1021 = vmul.f32 %v781, %v915
        %v1022 = vmul.f32 %v782, %v925
        %v1023 = vmul.f32 %v783, %v935
        %v1024 = vmul.f32 %v784, %v945
        %v1025 = vmul.f32 %v785, %v955
        %v1026 = vmul.f32 %v786, %v965
        %v1027 = vmul.f32 %v787, %v975
        %v1028 = vmul.f32 %v788, %v985
        %v1029 = vmul.f32 %v789, %v995
        %v1030 = vmul.f32 %v790, %v1005
        %v1031 = vmul.f32 %v791, %v1015
        %1032 = vst [vmem:[%s252] sm:$0xff] %v1016
        %1033 = vst [vmem:[%s252 + $0x8] sm:$0xff] %v1017
        %1034 = vst [vmem:[%s252 + $0x10] sm:$0xff] %v1018
        %1035 = vst [vmem:[%s252 + $0x18] sm:$0xff] %v1019
        %1036 = vst [vmem:[%s252 + $0x20] sm:$0xff] %v1020
        %1037 = vst [vmem:[%s252 + $0x28] sm:$0xff] %v1021
        %1038 = vst [vmem:[%s252 + $0x30] sm:$0xff] %v1022
        %1039 = vst [vmem:[%s252 + $0x38] sm:$0xff] %v1023
        %1040 = vst [vmem:[%s252 + $0x40] sm:$0xff] %v1024
        %1041 = vst [vmem:[%s252 + $0x48] sm:$0xff] %v1025
        %1042 = vst [vmem:[%s252 + $0x50] sm:$0xff] %v1026
        %1043 = vst [vmem:[%s252 + $0x58] sm:$0xff] %v1027
        %1044 = vst [vmem:[%s252 + $0x60] sm:$0xff] %v1028
        %1045 = vst [vmem:[%s252 + $0x68] sm:$0xff] %v1029
        %1046 = vst [vmem:[%s252 + $0x70] sm:$0xff] %v1030
        %1047 = vst [vmem:[%s252 + $0x78] sm:$0xff] %v1031
      $region44: #{encoder_forward.3} parent=35 // pred_fallthru
        _
      %s1048 = smul.u32 16, %s19
      %p1049 = scmp.lt.s32.totalorder %s1048, 31
      %s1050 = scalar_select %p1049, %s1048, 31
      %s1051 = smul.addr %s1050, 8
      %s1052 = scalar_lea.vmem %s4, %s1051
      // Predicated region
      $region45: #{encoder_forward.3} parent=35 // pred_check
        %p1053 = pneg %p141
      $region46: #{encoder_forward.3} parent=35 // pred_check_branch
        %1055 = sbr.rel (%p1053) target = $region48
      $region47: #{encoder_forward.3} parent=35 // pred_region
        %s1056 = smul.u32 16, %s19
      $region48: #{encoder_forward.3} parent=35 // pred_fallthru
        _
    $region36: #{encoder_forward.3} parent=5 // pred_fallthru
      _
    %p1057 = scmp.le.s32.totalorder 2, %s10
    // Predicated region
    $region49: #{encoder_forward.3} parent=5 // pred_check
      %p1058 = pneg %p1057
    $region50: #{encoder_forward.3} parent=5 // pred_check_branch
      %1060 = sbr.rel (%p1058) target = $region52
    $region51: #{encoder_forward.3} parent=5 // pred_region
      %s1061 = ssub.s32 %s10, 2
      // Predicated region
      $region53: #{encoder_forward.3} parent=51 // pred_check
        %p1062 = pneg %p147
      $region54: #{encoder_forward.3} parent=51 // pred_check_branch
        %1064 = sbr.rel (%p1062) target = $region56
      $region55: #{encoder_forward.3} parent=51 // pred_region
        %s1065 = smul.u32 16, %s21
        %p1066 = scmp.lt.s32.totalorder %s1065, 31
        %s1067 = scalar_select %p1066, %s1065, 31
        %s1068 = smul.addr %s1067, 8
        %s1069 = scalar_lea.vmem %s4, %s1068
      $region56: #{encoder_forward.3} parent=51 // pred_fallthru
        _
    $region52: #{encoder_forward.3} parent=5 // pred_fallthru
      _
  $region6: #{encoder_forward.3} parent=0 // loop_footer
    %s14 = sadd.s32 1, %s10
  $region7: #{encoder_forward.3} parent=0 // loop_footer_branch
    %9 = sbr.rel target = $region3
  $region8: #{encoder_forward.3} parent=0 // loop_exit
    _

</llo_original>
